<compile_context>
chip_gen: v6e
topology: v6e:2x2x1
jax: 0.10.0
libtpu: 0.0.40
codegen_flags: <defaults>
</compile_context>

<pallas_src>
import numpy as np
import jax
import jax.numpy as jnp
from jax.experimental import pallas as pl
from jax.experimental.pallas import tpu as pltpu


# ----------------------------- static geometry ------------------------------
H_IN = 28                 # MNIST spatial size (fc1's 160 = 10*4*4 pins it)
WP = 32                   # image rows padded 28 -> 32 lanes
K = 5
C1, C2 = 4, 10            # conv1 / conv2 output channels
P1H = 12                  # pooled conv1 spatial size (28-4 -> 24 -> 12)
P2H = 4                   # pooled conv2 spatial size (12-4 ->  8 ->  4)
CHUNK1 = 64               # lanes per pooled-conv1 row (48 real = C1*P1H)
CHUNK2 = 64               # lanes per pooled-conv2 row (40 real = C2*P2H)
G1 = P1H * CHUNK1         # 768 : p1 lane width
G2 = P2H * CHUNK2         # 256 : p2 lane width
NB1 = 6                   # conv1 row bands (each yields 2 pooled rows)
NB2 = 2                   # conv2 row bands
K1 = 8 * WP               # 256 : conv1 band depth (8 image rows x 32)
N1 = 4 * 2 * CHUNK1       # 512 : conv1 band outputs (4 phases x 2 rows x 64)
K2 = 8 * CHUNK1           # 512 : conv2 band depth (8 p1 rows x 64)
N2 = 4 * 2 * CHUNK2       # 512
FC_PAD = 128              # fc widths padded to 128 lanes
NEG_BIG = -1e30           # "-inf" bias for padded fc2 logits (f32 only!)


# --------------------- static scatter-index construction --------------------
def _conv1_band_index():
    """Band weight for conv1: rows = band-local (image_row rr < 8, col w < 28)
    -> rr*32 + w ; cols = phase g * 128 + pooled-row parity u * 64 + co*12 + j.
    Same matrix for every band t (shift invariance)."""
    sent = C1 * 1 * K * K
    idx = np.full((K1, N1), sent, np.int32)
    for g in range(4):
        di, dj = divmod(g, 2)
        for u in range(2):
            for co in range(C1):
                for j in range(P1H):
                    col = g * 128 + u * CHUNK1 + co * P1H + j
                    for ki in range(K):
                        for kj in range(K):
                            row = (2 * u + di + ki) * WP + (2 * j + dj + kj)
                            idx[row, col] = (co * K + ki) * K + kj
    return idx


def _conv2_band_index():
    """Band weight for conv2: rows = band-local p1 lane (rr*64 + ci*12 + s);
    cols = g*128 + u*64 + d*4 + j2.  Same matrix for both bands."""
    sent = C2 * C1 * K * K
    idx = np.full((K2, N2), sent, np.int32)
    for g in range(4):
        di, dj = divmod(g, 2)
        for u in range(2):
            for d in range(C2):
                for j2 in range(P2H):
                    col = g * 128 + u * CHUNK2 + d * P2H + j2
                    for ci in range(C1):
                        for ki in range(K):
                            for kj in range(K):
                                row = ((2 * u + di + ki) * CHUNK1
                                       + ci * P1H + (2 * j2 + dj + kj))
                                idx[row, col] = ((d * C1 + ci) * K + ki) * K + kj
    return idx


def _fc1_index():
    """fc1 weight rows permuted to the p2 lane layout (64*i2 + 4*d + j2),
    i.e. torch.flatten(NCHW) order folded into the weight."""
    sent = 100 * 160
    idx = np.full((G2, FC_PAD), sent, np.int32)
    for i2 in range(P2H):
        for d in range(C2):
            for j2 in range(P2H):
                row = i2 * CHUNK2 + d * P2H + j2
                f = (d * P2H + i2) * P2H + j2          # torch flat index
                for o in range(100):
                    idx[row, o] = o * 160 + f
    return idx


def _bias1_index():
    idx = np.full((G1,), C1, np.int32)                 # sentinel -> 0
    for i in range(P1H):
        for co in range(C1):
            for j in range(P1H):
                idx[i * CHUNK1 + co * P1H + j] = co
    return idx


def _bias2_index():
    idx = np.full((G2,), C2, np.int32)
    for i2 in range(P2H):
        for d in range(C2):
            for j2 in range(P2H):
                idx[i2 * CHUNK2 + d * P2H + j2] = d
    return idx


_W1_IDX = _conv1_band_index()
_W2_IDX = _conv2_band_index()
_FC1_IDX = _fc1_index()
_B1_IDX = _bias1_index()
_B2_IDX = _bias2_index()


# ----------------------------- parameters -----------------------------------
def init_params(key):
    ks = jax.random.split(key, 8)

    def rnd(k, shape, scale):
        return (scale * jax.random.normal(k, shape)).astype(jnp.float32)

    # shapes mirror nn.Conv2d / nn.Linear parameters from Net.__init__
    return {
        "conv1_w": rnd(ks[0], (4, 1, 5, 5), 0.2),
        "conv1_b": rnd(ks[1], (4,), 0.1),
        "conv2_w": rnd(ks[2], (10, 4, 5, 5), 0.1),
        "conv2_b": rnd(ks[3], (10,), 0.1),
        "fc1_w": rnd(ks[4], (100, 160), 0.05),
        "fc1_b": rnd(ks[5], (100,), 0.05),
        "fc2_w": rnd(ks[6], (10, 100), 0.05),
        "fc2_b": rnd(ks[7], (10,), 0.05),
    }


def prepare_params(params):
    """One-time weight preprocessing (outside the hot path): scatter the conv
    kernels into the shared band matrices, permute fc1 rows to the internal p2
    lane layout, pad fc dims to 128 lanes, cast matmul operands to bf16."""

    def gather(raw, idx):
        flat = jnp.concatenate([raw.reshape(-1).astype(jnp.float32),
                                jnp.zeros((1,), jnp.float32)])
        return flat[jnp.asarray(idx)]

    w1 = gather(params["conv1_w"], _W1_IDX).astype(jnp.bfloat16)      # (256,512)
    w2 = gather(params["conv2_w"], _W2_IDX).astype(jnp.bfloat16)      # (512,512)
    fc1w = gather(params["fc1_w"], _FC1_IDX).astype(jnp.bfloat16)     # (256,128)
    b1 = gather(params["conv1_b"], _B1_IDX).reshape(1, G1)            # (1,768) f32
    b2 = gather(params["conv2_b"], _B2_IDX).reshape(1, G2)            # (1,256) f32
    fc1b = jnp.zeros((FC_PAD,), jnp.float32).at[:100].set(
        params["fc1_b"].astype(jnp.float32)).reshape(1, FC_PAD)
    fc2w = jnp.zeros((FC_PAD, FC_PAD), jnp.float32).at[:100, :10].set(
        params["fc2_w"].T.astype(jnp.float32)).astype(jnp.bfloat16)
    fc2b = jnp.full((FC_PAD,), NEG_BIG, jnp.float32).at[:10].set(
        params["fc2_b"].astype(jnp.float32)).reshape(1, FC_PAD)

    return {"w1": w1, "b1": b1, "w2": w2, "b2": b2,
            "fc1w": fc1w, "fc1b": fc1b, "fc2w": fc2w, "fc2b": fc2b}


# ----------------------------- fused kernel ---------------------------------
def _net_kernel(x_ref, w1_ref, b1_ref, w2_ref, b2_ref,
                fc1w_ref, fc1b_ref, fc2w_ref, fc2b_ref, o_ref):
    # ---- conv1 + 2x2 max-pool: 6 row-band matmuls, shared weight ----
    # Band t reads image rows 4t..4t+7 (lanes [128t, 128t+256), 128-aligned)
    # and yields pooled rows {2t, 2t+1}.  The 4 pool phases land in 4 aligned
    # 128-lane column groups, so the pool max fuses right after the dot and
    # the largest pre-pool intermediate is (tb, 512) f32.
    w1 = w1_ref[...]
    c1 = []
    for t in range(NB1):
        y = jnp.dot(x_ref[:, 128 * t: 128 * t + K1], w1,
                    preferred_element_type=jnp.float32)           # (tb, 512)
        c1.append(jnp.maximum(jnp.maximum(y[:, 0:128], y[:, 128:256]),
                              jnp.maximum(y[:, 256:384], y[:, 384:512])))
    # pool-before-(bias+ReLU) is exact: per-channel bias is constant over each
    # 2x2 window and max/ReLU are monotone.
    p1 = jnp.maximum(jnp.concatenate(c1, axis=1) + b1_ref[...], 0.0)  # (tb,768)
    p1 = p1.astype(jnp.bfloat16)

    # ---- conv2 + 2x2 max-pool: 2 row-band matmuls, shared weight ----
    w2 = w2_ref[...]
    c2 = []
    for t in range(NB2):
        y = jnp.dot(p1[:, 256 * t: 256 * t + K2], w2,
                    preferred_element_type=jnp.float32)           # (tb, 512)
        c2.append(jnp.maximum(jnp.maximum(y[:, 0:128], y[:, 128:256]),
                              jnp.maximum(y[:, 256:384], y[:, 384:512])))
    p2 = jnp.maximum(jnp.concatenate(c2, axis=1) + b2_ref[...], 0.0)  # (tb,256)

    # ---- fc1 + ReLU (padded lanes stay exactly zero) ----
    h = jnp.maximum(
        jnp.dot(p2.astype(jnp.bfloat16), fc1w_ref[...],
                preferred_element_type=jnp.float32) + fc1b_ref[...], 0.0)

    # ---- fc2 + log_softmax; padded logits carry a -1e30 f32 bias so the
    # row max/sum ignore them (exp underflows to exactly 0) ----
    z = jnp.dot(h.astype(jnp.bfloat16), fc2w_ref[...],
                preferred_element_type=jnp.float32) + fc2b_ref[...]
    m = jnp.max(z, axis=1, keepdims=True)
    e = jnp.exp(z - m)
    o_ref[...] = (z - m) - jnp.log(jnp.sum(e, axis=1, keepdims=True))


# ----------------------------- forward wrapper ------------------------------
def _round_up(x, m):
    return (x + m - 1) // m * m


def _pick_tile(n):
    """Batch tile: up to 512 rows; for n >= ~64 always split into >= 2 tiles
    so both TensorCores on v7x get work via the 'parallel' batch axis."""
    n16 = _round_up(max(n, 1), 16)
    if n16 <= 32:
        return n16
    return min(512, _round_up((n16 + 1) // 2, 16))


def net_forward(prepped, x_nhwc):
    """x_nhwc: (N, 28, 28, 1) float. Returns (N, 10) log-probabilities."""
    n = x_nhwc.shape[0]
    tb = _pick_tile(n)
    n_pad = _round_up(n, tb)

    # Row-pad the image width 28 -> 32 lanes so every conv1 band slice
    # (6 rows x 32 = 192 real of 256 lanes) starts at a 128-lane boundary.
    x = x_nhwc.reshape(n, H_IN, H_IN).astype(jnp.float32)
    x = jnp.pad(x, ((0, n_pad - n), (0, 0), (0, WP - H_IN)))
    x = x.reshape(n_pad, H_IN * WP).astype(jnp.bfloat16)          # (n_pad, 896)

    def row_spec(width):
        return pl.BlockSpec((tb, width), lambda b: (b, 0))

    def const_spec(arr):
        # constant block index -> weights/biases stay VMEM-resident across
        # grid steps (no per-step re-DMA).  Total weight footprint is ~0.9 MiB
        # after the banded restructure, so double-buffer overhead is noise.
        return pl.BlockSpec(arr.shape, lambda b: (0, 0))

    out = pl.pallas_call(
        _net_kernel,
        out_shape=jax.ShapeDtypeStruct((n_pad, FC_PAD), jnp.float32),
        grid=(n_pad // tb,),
        in_specs=[
            row_spec(H_IN * WP),
            const_spec(prepped["w1"]), const_spec(prepped["b1"]),
            const_spec(prepped["w2"]), const_spec(prepped["b2"]),
            const_spec(prepped["fc1w"]), const_spec(prepped["fc1b"]),
            const_spec(prepped["fc2w"]), const_spec(prepped["fc2b"]),
        ],
        out_specs=pl.BlockSpec((tb, FC_PAD), lambda b: (b, 0)),
        compiler_params=pltpu.CompilerParams(
            dimension_semantics=("parallel",),      # shard batch across TCs
            vmem_limit_bytes=32 * 1024 * 1024,      # ~10 MiB measured footprint
        ),
    )(x, prepped["w1"], prepped["b1"], prepped["w2"], prepped["b2"],
      prepped["fc1w"], prepped["fc1b"], prepped["fc2w"], prepped["fc2b"])

    return out[:n, :10]


# ----------------------------- pure-JAX reference ---------------------------
def _reference_forward(params, x_nhwc):
    def im2col(x, k):
        n, h, w, c = x.shape
        ho, wo = h - k + 1, w - k + 1
        cols = [x[:, ki:ki + ho, kj:kj + wo, ci]
                for ci in range(c) for ki in range(k) for kj in range(k)]
        return jnp.stack(cols, axis=-1).reshape(n * ho * wo, c * k * k)

    def maxpool(x):
        return jnp.maximum(
            jnp.maximum(x[:, 0::2, 0::2, :], x[:, 0::2, 1::2, :]),
            jnp.maximum(x[:, 1::2, 0::2, :], x[:, 1::2, 1::2, :]))

    n = x_nhwc.shape[0]
    y = im2col(x_nhwc, K) @ params["conv1_w"].reshape(C1, -1).T + params["conv1_b"]
    y = maxpool(jnp.maximum(y, 0.0).reshape(n, 24, 24, C1))
    y = im2col(y, K) @ params["conv2_w"].reshape(C2, -1).T + params["conv2_b"]
    y = maxpool(jnp.maximum(y, 0.0).reshape(n, 8, 8, C2))
    flat = jnp.transpose(y, (0, 3, 1, 2)).reshape(n, 160)   # torch.flatten NCHW
    h = jnp.maximum(flat @ params["fc1_w"].T + params["fc1_b"], 0.0)
    z = h @ params["fc2_w"].T + params["fc2_b"]
    return jax.nn.log_softmax(z, axis=1)


# ----------------------------- main ------------------------------------------
if __name__ == "__main__":
    key = jax.random.PRNGKey(0)
    kx, kp = jax.random.split(key)
    params = init_params(kp)
    prepped = prepare_params(params)

    fwd = jax.jit(net_forward)

    # small batch (single grid step)
    x2 = jax.random.uniform(kx, (2, 28, 28, 1), dtype=jnp.float32)
    out2 = jax.block_until_ready(fwd(prepped, x2))
    assert out2.shape == (2, 10)
    assert bool(jnp.all(jnp.isfinite(out2)))
    assert bool(jnp.allclose(jnp.sum(jnp.exp(out2), axis=1), 1.0, atol=1e-4))
    ref2 = _reference_forward(params, x2)
    assert bool(jnp.max(jnp.abs(out2 - ref2)) < 0.1)   # bf16-matmul tolerance

    # multi-tile batch (grid == 2) exercises the batch grid + padding path
    x64 = jax.random.uniform(jax.random.PRNGKey(1), (64, 28, 28, 1),
                             dtype=jnp.float32)
    out64 = jax.block_until_ready(fwd(prepped, x64))
    ref64 = _reference_forward(params, x64)
    assert out64.shape == (64, 10)
    assert bool(jnp.all(jnp.isfinite(out64)))
    assert bool(jnp.max(jnp.abs(out64 - ref64)) < 0.1)

    print("KERNEL_OK")
</pallas_src>

<mosaic_0001>
module attributes {stable_mosaic.version = 11 : i64} {
  func.func @_net_kernel(%arg0: i32, %arg1: memref<16x896xbf16, #tpu.memory_space<vmem>>, %arg2: memref<256x512xbf16, #tpu.memory_space<vmem>>, %arg3: memref<1x768xf32, #tpu.memory_space<vmem>>, %arg4: memref<512x512xbf16, #tpu.memory_space<vmem>>, %arg5: memref<1x256xf32, #tpu.memory_space<vmem>>, %arg6: memref<256x128xbf16, #tpu.memory_space<vmem>>, %arg7: memref<1x128xf32, #tpu.memory_space<vmem>>, %arg8: memref<128x128xbf16, #tpu.memory_space<vmem>>, %arg9: memref<1x128xf32, #tpu.memory_space<vmem>>, %arg10: memref<16x128xf32, #tpu.memory_space<vmem>>) attributes {dimension_semantics = [#tpu.dimension_semantics<parallel>], iteration_bounds = array<i64: 1>, scalar_prefetch = 0 : i64, scratch_operands = 0 : i64, tpu.core_type = #tpu.core_type<tc>, window_params = [{transform_indices = @transform_0, window_bounds = array<i64: 16, 896>}, {pipeline_mode = #tpu.pipeline_mode<synchronous>, transform_indices = @transform_1, window_bounds = array<i64: 256, 512>}, {pipeline_mode = #tpu.pipeline_mode<synchronous>, transform_indices = @transform_2, window_bounds = array<i64: 1, 768>}, {pipeline_mode = #tpu.pipeline_mode<synchronous>, transform_indices = @transform_3, window_bounds = array<i64: 512, 512>}, {pipeline_mode = #tpu.pipeline_mode<synchronous>, transform_indices = @transform_4, window_bounds = array<i64: 1, 256>}, {pipeline_mode = #tpu.pipeline_mode<synchronous>, transform_indices = @transform_5, window_bounds = array<i64: 256, 128>}, {pipeline_mode = #tpu.pipeline_mode<synchronous>, transform_indices = @transform_6, window_bounds = array<i64: 1, 128>}, {pipeline_mode = #tpu.pipeline_mode<synchronous>, transform_indices = @transform_7, window_bounds = array<i64: 128, 128>}, {pipeline_mode = #tpu.pipeline_mode<synchronous>, transform_indices = @transform_8, window_bounds = array<i64: 1, 128>}, {transform_indices = @transform_9, window_bounds = array<i64: 16, 128>}]} {
    %c0 = arith.constant 0 : index
    %c0_0 = arith.constant 0 : index
    %0 = vector.load %arg2[%c0, %c0_0] : memref<256x512xbf16, #tpu.memory_space<vmem>>, vector<256x512xbf16>
    %c0_1 = arith.constant 0 : index
    %c0_2 = arith.constant 0 : index
    %1 = vector.load %arg1[%c0_1, %c0_2] : memref<16x896xbf16, #tpu.memory_space<vmem>>, vector<16x256xbf16>
    %cst = arith.constant dense<0.000000e+00> : vector<16x512xf32>
    %2 = tpu.matmul %1, %0, %cst {dimension_numbers = #tpu.dot_dimension_numbers<[1], [0], [0], [1], [0, 0, 1, 1], [], []>} : vector<16x256xbf16>, vector<256x512xbf16>, vector<16x512xf32> -> vector<16x512xf32>
    %3 = vector.extract_strided_slice %2 {offsets = [0, 0], sizes = [16, 128], strides = [1, 1]} : vector<16x512xf32> to vector<16x128xf32>
    %4 = vector.extract_strided_slice %2 {offsets = [0, 128], sizes = [16, 128], strides = [1, 1]} : vector<16x512xf32> to vector<16x128xf32>
    %5 = arith.maximumf %3, %4 : vector<16x128xf32>
    %6 = vector.extract_strided_slice %2 {offsets = [0, 256], sizes = [16, 128], strides = [1, 1]} : vector<16x512xf32> to vector<16x128xf32>
    %7 = vector.extract_strided_slice %2 {offsets = [0, 384], sizes = [16, 128], strides = [1, 1]} : vector<16x512xf32> to vector<16x128xf32>
    %8 = arith.maximumf %6, %7 : vector<16x128xf32>
    %9 = arith.maximumf %5, %8 : vector<16x128xf32>
    %c0_3 = arith.constant 0 : index
    %c128 = arith.constant 128 : index
    %10 = vector.load %arg1[%c0_3, %c128] : memref<16x896xbf16, #tpu.memory_space<vmem>>, vector<16x256xbf16>
    %cst_4 = arith.constant dense<0.000000e+00> : vector<16x512xf32>
    %11 = tpu.matmul %10, %0, %cst_4 {dimension_numbers = #tpu.dot_dimension_numbers<[1], [0], [0], [1], [0, 0, 1, 1], [], []>} : vector<16x256xbf16>, vector<256x512xbf16>, vector<16x512xf32> -> vector<16x512xf32>
    %12 = vector.extract_strided_slice %11 {offsets = [0, 0], sizes = [16, 128], strides = [1, 1]} : vector<16x512xf32> to vector<16x128xf32>
    %13 = vector.extract_strided_slice %11 {offsets = [0, 128], sizes = [16, 128], strides = [1, 1]} : vector<16x512xf32> to vector<16x128xf32>
    %14 = arith.maximumf %12, %13 : vector<16x128xf32>
    %15 = vector.extract_strided_slice %11 {offsets = [0, 256], sizes = [16, 128], strides = [1, 1]} : vector<16x512xf32> to vector<16x128xf32>
    %16 = vector.extract_strided_slice %11 {offsets = [0, 384], sizes = [16, 128], strides = [1, 1]} : vector<16x512xf32> to vector<16x128xf32>
    %17 = arith.maximumf %15, %16 : vector<16x128xf32>
    %18 = arith.maximumf %14, %17 : vector<16x128xf32>
    %c0_5 = arith.constant 0 : index
    %c256 = arith.constant 256 : index
    %19 = vector.load %arg1[%c0_5, %c256] : memref<16x896xbf16, #tpu.memory_space<vmem>>, vector<16x256xbf16>
    %cst_6 = arith.constant dense<0.000000e+00> : vector<16x512xf32>
    %20 = tpu.matmul %19, %0, %cst_6 {dimension_numbers = #tpu.dot_dimension_numbers<[1], [0], [0], [1], [0, 0, 1, 1], [], []>} : vector<16x256xbf16>, vector<256x512xbf16>, vector<16x512xf32> -> vector<16x512xf32>
    %21 = vector.extract_strided_slice %20 {offsets = [0, 0], sizes = [16, 128], strides = [1, 1]} : vector<16x512xf32> to vector<16x128xf32>
    %22 = vector.extract_strided_slice %20 {offsets = [0, 128], sizes = [16, 128], strides = [1, 1]} : vector<16x512xf32> to vector<16x128xf32>
    %23 = arith.maximumf %21, %22 : vector<16x128xf32>
    %24 = vector.extract_strided_slice %20 {offsets = [0, 256], sizes = [16, 128], strides = [1, 1]} : vector<16x512xf32> to vector<16x128xf32>
    %25 = vector.extract_strided_slice %20 {offsets = [0, 384], sizes = [16, 128], strides = [1, 1]} : vector<16x512xf32> to vector<16x128xf32>
    %26 = arith.maximumf %24, %25 : vector<16x128xf32>
    %27 = arith.maximumf %23, %26 : vector<16x128xf32>
    %c0_7 = arith.constant 0 : index
    %c384 = arith.constant 384 : index
    %28 = vector.load %arg1[%c0_7, %c384] : memref<16x896xbf16, #tpu.memory_space<vmem>>, vector<16x256xbf16>
    %cst_8 = arith.constant dense<0.000000e+00> : vector<16x512xf32>
    %29 = tpu.matmul %28, %0, %cst_8 {dimension_numbers = #tpu.dot_dimension_numbers<[1], [0], [0], [1], [0, 0, 1, 1], [], []>} : vector<16x256xbf16>, vector<256x512xbf16>, vector<16x512xf32> -> vector<16x512xf32>
    %30 = vector.extract_strided_slice %29 {offsets = [0, 0], sizes = [16, 128], strides = [1, 1]} : vector<16x512xf32> to vector<16x128xf32>
    %31 = vector.extract_strided_slice %29 {offsets = [0, 128], sizes = [16, 128], strides = [1, 1]} : vector<16x512xf32> to vector<16x128xf32>
    %32 = arith.maximumf %30, %31 : vector<16x128xf32>
    %33 = vector.extract_strided_slice %29 {offsets = [0, 256], sizes = [16, 128], strides = [1, 1]} : vector<16x512xf32> to vector<16x128xf32>
    %34 = vector.extract_strided_slice %29 {offsets = [0, 384], sizes = [16, 128], strides = [1, 1]} : vector<16x512xf32> to vector<16x128xf32>
    %35 = arith.maximumf %33, %34 : vector<16x128xf32>
    %36 = arith.maximumf %32, %35 : vector<16x128xf32>
    %c0_9 = arith.constant 0 : index
    %c512 = arith.constant 512 : index
    %37 = vector.load %arg1[%c0_9, %c512] : memref<16x896xbf16, #tpu.memory_space<vmem>>, vector<16x256xbf16>
    %cst_10 = arith.constant dense<0.000000e+00> : vector<16x512xf32>
    %38 = tpu.matmul %37, %0, %cst_10 {dimension_numbers = #tpu.dot_dimension_numbers<[1], [0], [0], [1], [0, 0, 1, 1], [], []>} : vector<16x256xbf16>, vector<256x512xbf16>, vector<16x512xf32> -> vector<16x512xf32>
    %39 = vector.extract_strided_slice %38 {offsets = [0, 0], sizes = [16, 128], strides = [1, 1]} : vector<16x512xf32> to vector<16x128xf32>
    %40 = vector.extract_strided_slice %38 {offsets = [0, 128], sizes = [16, 128], strides = [1, 1]} : vector<16x512xf32> to vector<16x128xf32>
    %41 = arith.maximumf %39, %40 : vector<16x128xf32>
    %42 = vector.extract_strided_slice %38 {offsets = [0, 256], sizes = [16, 128], strides = [1, 1]} : vector<16x512xf32> to vector<16x128xf32>
    %43 = vector.extract_strided_slice %38 {offsets = [0, 384], sizes = [16, 128], strides = [1, 1]} : vector<16x512xf32> to vector<16x128xf32>
    %44 = arith.maximumf %42, %43 : vector<16x128xf32>
    %45 = arith.maximumf %41, %44 : vector<16x128xf32>
    %c0_11 = arith.constant 0 : index
    %c640 = arith.constant 640 : index
    %46 = vector.load %arg1[%c0_11, %c640] : memref<16x896xbf16, #tpu.memory_space<vmem>>, vector<16x256xbf16>
    %cst_12 = arith.constant dense<0.000000e+00> : vector<16x512xf32>
    %47 = tpu.matmul %46, %0, %cst_12 {dimension_numbers = #tpu.dot_dimension_numbers<[1], [0], [0], [1], [0, 0, 1, 1], [], []>} : vector<16x256xbf16>, vector<256x512xbf16>, vector<16x512xf32> -> vector<16x512xf32>
    %48 = vector.extract_strided_slice %47 {offsets = [0, 0], sizes = [16, 128], strides = [1, 1]} : vector<16x512xf32> to vector<16x128xf32>
    %49 = vector.extract_strided_slice %47 {offsets = [0, 128], sizes = [16, 128], strides = [1, 1]} : vector<16x512xf32> to vector<16x128xf32>
    %50 = arith.maximumf %48, %49 : vector<16x128xf32>
    %51 = vector.extract_strided_slice %47 {offsets = [0, 256], sizes = [16, 128], strides = [1, 1]} : vector<16x512xf32> to vector<16x128xf32>
    %52 = vector.extract_strided_slice %47 {offsets = [0, 384], sizes = [16, 128], strides = [1, 1]} : vector<16x512xf32> to vector<16x128xf32>
    %53 = arith.maximumf %51, %52 : vector<16x128xf32>
    %54 = arith.maximumf %50, %53 : vector<16x128xf32>
    %55 = tpu.concatenate %9, %18, %27, %36, %45, %54 in 1 : vector<16x128xf32>, vector<16x128xf32>, vector<16x128xf32>, vector<16x128xf32>, vector<16x128xf32>, vector<16x128xf32> -> vector<16x768xf32>
    %c0_13 = arith.constant 0 : index
    %c0_14 = arith.constant 0 : index
    %56 = vector.load %arg3[%c0_13, %c0_14] : memref<1x768xf32, #tpu.memory_space<vmem>>, vector<1x768xf32>
    %57 = vector.broadcast %56 : vector<1x768xf32> to vector<16x768xf32>
    %58 = arith.addf %55, %57 : vector<16x768xf32>
    %cst_15 = arith.constant 0.000000e+00 : f32
    %59 = vector.broadcast %cst_15 : f32 to vector<16x768xf32>
    %60 = arith.maximumf %58, %59 : vector<16x768xf32>
    %61 = arith.truncf %60 : vector<16x768xf32> to vector<16x768xbf16>
    %c0_16 = arith.constant 0 : index
    %c0_17 = arith.constant 0 : index
    %62 = vector.load %arg4[%c0_16, %c0_17] : memref<512x512xbf16, #tpu.memory_space<vmem>>, vector<512x512xbf16>
    %63 = vector.extract_strided_slice %61 {offsets = [0, 0], sizes = [16, 512], strides = [1, 1]} : vector<16x768xbf16> to vector<16x512xbf16>
    %cst_18 = arith.constant dense<0.000000e+00> : vector<16x512xf32>
    %64 = tpu.matmul %63, %62, %cst_18 {dimension_numbers = #tpu.dot_dimension_numbers<[1], [0], [0], [1], [0, 0, 1, 1], [], []>} : vector<16x512xbf16>, vector<512x512xbf16>, vector<16x512xf32> -> vector<16x512xf32>
    %65 = vector.extract_strided_slice %64 {offsets = [0, 0], sizes = [16, 128], strides = [1, 1]} : vector<16x512xf32> to vector<16x128xf32>
    %66 = vector.extract_strided_slice %64 {offsets = [0, 128], sizes = [16, 128], strides = [1, 1]} : vector<16x512xf32> to vector<16x128xf32>
    %67 = arith.maximumf %65, %66 : vector<16x128xf32>
    %68 = vector.extract_strided_slice %64 {offsets = [0, 256], sizes = [16, 128], strides = [1, 1]} : vector<16x512xf32> to vector<16x128xf32>
    %69 = vector.extract_strided_slice %64 {offsets = [0, 384], sizes = [16, 128], strides = [1, 1]} : vector<16x512xf32> to vector<16x128xf32>
    %70 = arith.maximumf %68, %69 : vector<16x128xf32>
    %71 = arith.maximumf %67, %70 : vector<16x128xf32>
    %72 = vector.extract_strided_slice %61 {offsets = [0, 256], sizes = [16, 512], strides = [1, 1]} : vector<16x768xbf16> to vector<16x512xbf16>
    %cst_19 = arith.constant dense<0.000000e+00> : vector<16x512xf32>
    %73 = tpu.matmul %72, %62, %cst_19 {dimension_numbers = #tpu.dot_dimension_numbers<[1], [0], [0], [1], [0, 0, 1, 1], [], []>} : vector<16x512xbf16>, vector<512x512xbf16>, vector<16x512xf32> -> vector<16x512xf32>
    %74 = vector.extract_strided_slice %73 {offsets = [0, 0], sizes = [16, 128], strides = [1, 1]} : vector<16x512xf32> to vector<16x128xf32>
    %75 = vector.extract_strided_slice %73 {offsets = [0, 128], sizes = [16, 128], strides = [1, 1]} : vector<16x512xf32> to vector<16x128xf32>
    %76 = arith.maximumf %74, %75 : vector<16x128xf32>
    %77 = vector.extract_strided_slice %73 {offsets = [0, 256], sizes = [16, 128], strides = [1, 1]} : vector<16x512xf32> to vector<16x128xf32>
    %78 = vector.extract_strided_slice %73 {offsets = [0, 384], sizes = [16, 128], strides = [1, 1]} : vector<16x512xf32> to vector<16x128xf32>
    %79 = arith.maximumf %77, %78 : vector<16x128xf32>
    %80 = arith.maximumf %76, %79 : vector<16x128xf32>
    %81 = tpu.concatenate %71, %80 in 1 : vector<16x128xf32>, vector<16x128xf32> -> vector<16x256xf32>
    %c0_20 = arith.constant 0 : index
    %c0_21 = arith.constant 0 : index
    %82 = vector.load %arg5[%c0_20, %c0_21] : memref<1x256xf32, #tpu.memory_space<vmem>>, vector<1x256xf32>
    %83 = vector.broadcast %82 : vector<1x256xf32> to vector<16x256xf32>
    %84 = arith.addf %81, %83 : vector<16x256xf32>
    %cst_22 = arith.constant 0.000000e+00 : f32
    %85 = vector.broadcast %cst_22 : f32 to vector<16x256xf32>
    %86 = arith.maximumf %84, %85 : vector<16x256xf32>
    %87 = arith.truncf %86 : vector<16x256xf32> to vector<16x256xbf16>
    %c0_23 = arith.constant 0 : index
    %c0_24 = arith.constant 0 : index
    %88 = vector.load %arg6[%c0_23, %c0_24] : memref<256x128xbf16, #tpu.memory_space<vmem>>, vector<256x128xbf16>
    %cst_25 = arith.constant dense<0.000000e+00> : vector<16x128xf32>
    %89 = tpu.matmul %87, %88, %cst_25 {dimension_numbers = #tpu.dot_dimension_numbers<[1], [0], [0], [1], [0, 0, 1, 1], [], []>} : vector<16x256xbf16>, vector<256x128xbf16>, vector<16x128xf32> -> vector<16x128xf32>
    %c0_26 = arith.constant 0 : index
    %c0_27 = arith.constant 0 : index
    %90 = vector.load %arg7[%c0_26, %c0_27] : memref<1x128xf32, #tpu.memory_space<vmem>>, vector<1x128xf32>
    %91 = vector.broadcast %90 : vector<1x128xf32> to vector<16x128xf32>
    %92 = arith.addf %89, %91 : vector<16x128xf32>
    %cst_28 = arith.constant 0.000000e+00 : f32
    %93 = vector.broadcast %cst_28 : f32 to vector<16x128xf32>
    %94 = arith.maximumf %92, %93 : vector<16x128xf32>
    %95 = arith.truncf %94 : vector<16x128xf32> to vector<16x128xbf16>
    %c0_29 = arith.constant 0 : index
    %c0_30 = arith.constant 0 : index
    %96 = vector.load %arg8[%c0_29, %c0_30] : memref<128x128xbf16, #tpu.memory_space<vmem>>, vector<128x128xbf16>
    %cst_31 = arith.constant dense<0.000000e+00> : vector<16x128xf32>
    %97 = tpu.matmul %95, %96, %cst_31 {dimension_numbers = #tpu.dot_dimension_numbers<[1], [0], [0], [1], [0, 0, 1, 1], [], []>} : vector<16x128xbf16>, vector<128x128xbf16>, vector<16x128xf32> -> vector<16x128xf32>
    %c0_32 = arith.constant 0 : index
    %c0_33 = arith.constant 0 : index
    %98 = vector.load %arg9[%c0_32, %c0_33] : memref<1x128xf32, #tpu.memory_space<vmem>>, vector<1x128xf32>
    %99 = vector.broadcast %98 : vector<1x128xf32> to vector<16x128xf32>
    %100 = arith.addf %97, %99 : vector<16x128xf32>
    %cst_34 = arith.constant dense<0xFF800000> : vector<16xf32>
    %101 = vector.multi_reduction <maximumf>, %100, %cst_34 [1] : vector<16x128xf32> to vector<16xf32>
    %102 = vector.shape_cast %101 : vector<16xf32> to vector<16x1xf32>
    %103 = vector.broadcast %102 : vector<16x1xf32> to vector<16x128xf32>
    %104 = arith.subf %100, %103 : vector<16x128xf32>
    %105 = math.exp %104 : vector<16x128xf32>
    %106 = vector.broadcast %102 : vector<16x1xf32> to vector<16x128xf32>
    %107 = arith.subf %100, %106 : vector<16x128xf32>
    %cst_35 = arith.constant dense<0.000000e+00> : vector<16xf32>
    %108 = vector.multi_reduction <add>, %105, %cst_35 [1] : vector<16x128xf32> to vector<16xf32>
    %109 = vector.shape_cast %108 : vector<16xf32> to vector<16x1xf32>
    %110 = math.log %109 : vector<16x1xf32>
    %111 = vector.broadcast %110 : vector<16x1xf32> to vector<16x128xf32>
    %112 = arith.subf %107, %111 : vector<16x128xf32>
    %c0_36 = arith.constant 0 : index
    %c0_37 = arith.constant 0 : index
    %113 = vector.load %arg10[%c0_36, %c0_37] : memref<16x128xf32, #tpu.memory_space<vmem>>, vector<16x128xf32>
    tpu.vector_store %arg10[%c0_36, %c0_37], %112 {strides = array<i32>} : memref<16x128xf32, #tpu.memory_space<vmem>>, vector<16x128xf32>,
    return
  }
  func.func @transform_0(%arg0: i32) -> (i32, i32) {
    %c0_i32 = arith.constant 0 : i32
    %c0_i32_0 = arith.constant 0 : i32
    return %arg0, %c0_i32 : i32, i32
  }
  func.func @transform_1(%arg0: i32) -> (i32, i32) {
    %c0_i32 = arith.constant 0 : i32
    %c0_i32_0 = arith.constant 0 : i32
    %c0_i32_1 = arith.constant 0 : i32
    return %c0_i32, %c0_i32_0 : i32, i32
  }
  func.func @transform_2(%arg0: i32) -> (i32, i32) {
    %c0_i32 = arith.constant 0 : i32
    %c0_i32_0 = arith.constant 0 : i32
    %c0_i32_1 = arith.constant 0 : i32
    return %c0_i32, %c0_i32_0 : i32, i32
  }
  func.func @transform_3(%arg0: i32) -> (i32, i32) {
    %c0_i32 = arith.constant 0 : i32
    %c0_i32_0 = arith.constant 0 : i32
    %c0_i32_1 = arith.constant 0 : i32
    return %c0_i32, %c0_i32_0 : i32, i32
  }
  func.func @transform_4(%arg0: i32) -> (i32, i32) {
    %c0_i32 = arith.constant 0 : i32
    %c0_i32_0 = arith.constant 0 : i32
    %c0_i32_1 = arith.constant 0 : i32
    return %c0_i32, %c0_i32_0 : i32, i32
  }
  func.func @transform_5(%arg0: i32) -> (i32, i32) {
    %c0_i32 = arith.constant 0 : i32
    %c0_i32_0 = arith.constant 0 : i32
    %c0_i32_1 = arith.constant 0 : i32
    return %c0_i32, %c0_i32_0 : i32, i32
  }
  func.func @transform_6(%arg0: i32) -> (i32, i32) {
    %c0_i32 = arith.constant 0 : i32
    %c0_i32_0 = arith.constant 0 : i32
    %c0_i32_1 = arith.constant 0 : i32
    return %c0_i32, %c0_i32_0 : i32, i32
  }
  func.func @transform_7(%arg0: i32) -> (i32, i32) {
    %c0_i32 = arith.constant 0 : i32
    %c0_i32_0 = arith.constant 0 : i32
    %c0_i32_1 = arith.constant 0 : i32
    return %c0_i32, %c0_i32_0 : i32, i32
  }
  func.func @transform_8(%arg0: i32) -> (i32, i32) {
    %c0_i32 = arith.constant 0 : i32
    %c0_i32_0 = arith.constant 0 : i32
    %c0_i32_1 = arith.constant 0 : i32
    return %c0_i32, %c0_i32_0 : i32, i32
  }
  func.func @transform_9(%arg0: i32) -> (i32, i32) {
    %c0_i32 = arith.constant 0 : i32
    %c0_i32_0 = arith.constant 0 : i32
    return %arg0, %c0_i32 : i32, i32
  }
}

</mosaic_0001>

<llo_original>
// kernel: net_forward.1
$region0: #{net_forward.1}
  #allocation0 [shape = 'u32[]', space=smem, size = 0x4, offset = 0x4, fixed_abs, tag = 'smem constant byte address 0x4 - core index']
  #allocation1 [shape = 'u32[144,128]{1,0:T(1,128)}', space=vmem, size = 0x12000, scoped, tag = 'internal scratch']
  %s0 = inlined_call_operand.vmem [shape: bf16[16,896], index: 0, kind: input, shape index: {}]
  %s1 = inlined_call_operand.vmem [shape: bf16[256,512], index: 1, kind: input, shape index: {}]
  %s2 = inlined_call_operand.vmem [shape: f32[1,768], index: 2, kind: input, shape index: {}]
  %s3 = inlined_call_operand.hbm [shape: bf16[512,512], index: 3, kind: input, shape index: {}]
  %s4 = inlined_call_operand.vmem [shape: f32[1,256], index: 4, kind: input, shape index: {}]
  %s5 = inlined_call_operand.vmem [shape: bf16[256,128], index: 5, kind: input, shape index: {}]
  %s6 = inlined_call_operand.vmem [shape: f32[1,128], index: 6, kind: input, shape index: {}]
  %s7 = inlined_call_operand.vmem [shape: bf16[128,128], index: 7, kind: input, shape index: {}]
  %s8 = inlined_call_operand.vmem [shape: f32[1,128], index: 8, kind: input, shape index: {}]
  %s9 = inlined_call_operand.vmem [shape: f32[16,128], index: 9, kind: output, shape index: {}]
  %s10 = sld [smem:[#allocation0]]
  $region50: #{net_forward.1} parent=0
    _
  %s12 = ssub.s32 1, %s10
  %s13 = scalar_select 0, %s12, %s10
  $region1: #{net_forward.1} parent=0
    #allocation2 [shape = 'u8[524288]{0}', space=vmem, size = 0x80000, scoped, tag = 'input window, operand 3, single buffered']
    #allocation3 [shape = 's32[1]{0}', space=sflag, size = 0x4, scoped, tag = 'scoped memory for net_forward.1']
    %14 = vsyncpa [#allocation3], 0
    // Predicated region
    $region2: #{net_forward.1} parent=1 // pred_check
      _
    $region3: #{net_forward.1} parent=1 // pred_check_branch
      %16 = sbr.rel (0) target = $region5
    $region4: #{net_forward.1} parent=1 // pred_region
      _
    $region5: #{net_forward.1} parent=1 // pred_fallthru
      _
    // Predicated region
    $region6: #{net_forward.1} parent=1 // pred_check
      _
    $region7: #{net_forward.1} parent=1 // pred_check_branch
      %18 = sbr.rel (0) target = $region9
    $region8: #{net_forward.1} parent=1 // pred_region
      _
    $region9: #{net_forward.1} parent=1 // pred_fallthru
      _
    // Predicated region
    $region10: #{net_forward.1} parent=1 // pred_check
      _
    $region11: #{net_forward.1} parent=1 // pred_check_branch
      %20 = sbr.rel (0) target = $region13
    $region12: #{net_forward.1} parent=1 // pred_region
      _
    $region13: #{net_forward.1} parent=1 // pred_fallthru
      _
    // Predicated region
    $region14: #{net_forward.1} parent=1 // pred_check
      _
    $region15: #{net_forward.1} parent=1 // pred_check_branch
      %22 = sbr.rel (0) target = $region17
    $region16: #{net_forward.1} parent=1 // pred_region
      %s24 = ssub.s32 16384, 16384
      %25 = vsyncadd [#allocation3], %s24
      %s26 = sshll.u32 [#allocation2], 4
      %s27 = int_to_ptr.vmem [resolvable:$true] %s26
      %32 = dma.hbm_to_vmem [thread:$0]  %s3, 16384, %s27, [#allocation3], 256, 256, 16
    $region17: #{net_forward.1} parent=1 // pred_fallthru
      _
    // Predicated region
    $region18: #{net_forward.1} parent=1 // pred_check
      _
    $region19: #{net_forward.1} parent=1 // pred_check_branch
      %34 = sbr.rel (0) target = $region21
    $region20: #{net_forward.1} parent=1 // pred_region
      _
    $region21: #{net_forward.1} parent=1 // pred_fallthru
      _
    // Predicated region
    $region22: #{net_forward.1} parent=1 // pred_check
      _
    $region23: #{net_forward.1} parent=1 // pred_check_branch
      %36 = sbr.rel (0) target = $region25
    $region24: #{net_forward.1} parent=1 // pred_region
      _
    $region25: #{net_forward.1} parent=1 // pred_fallthru
      _
    // Predicated region
    $region26: #{net_forward.1} parent=1 // pred_check
      _
    $region27: #{net_forward.1} parent=1 // pred_check_branch
      %38 = sbr.rel (0) target = $region29
    $region28: #{net_forward.1} parent=1 // pred_region
      _
    $region29: #{net_forward.1} parent=1 // pred_fallthru
      _
    // Predicated region
    $region30: #{net_forward.1} parent=1 // pred_check
      _
    $region31: #{net_forward.1} parent=1 // pred_check_branch
      %40 = sbr.rel (0) target = $region33
    $region32: #{net_forward.1} parent=1 // pred_region
      _
    $region33: #{net_forward.1} parent=1 // pred_fallthru
      _
    // Predicated region
    $region34: #{net_forward.1} parent=1 // pred_check
      _
    $region35: #{net_forward.1} parent=1 // pred_check_branch
      %42 = sbr.rel (0) target = $region37
    $region36: #{net_forward.1} parent=1 // pred_region
      _
    $region37: #{net_forward.1} parent=1 // pred_fallthru
      _
    // Predicated region
    $region38: #{net_forward.1} parent=1 // pred_check
      _
    $region39: #{net_forward.1} parent=1 // pred_check_branch
      %44 = sbr.rel (0) target = $region41
    $region40: #{net_forward.1} parent=1 // pred_region
      %45 = dma.done [#allocation3], 16384
    $region41: #{net_forward.1} parent=1 // pred_fallthru
      _
    %v47 = vld [vmem:[%s1] sm:$0xff]
    %v48 = vld [vmem:[%s1 + $0x8] sm:$0xff]
    %v49 = vld [vmem:[%s1 + $0x10] sm:$0xff]
    %v50 = vld [vmem:[%s1 + $0x18] sm:$0xff]
    %v51 = vld [vmem:[%s1 + $0x20] sm:$0xff]
    %v52 = vld [vmem:[%s1 + $0x28] sm:$0xff]
    %v53 = vld [vmem:[%s1 + $0x30] sm:$0xff]
    %v54 = vld [vmem:[%s1 + $0x38] sm:$0xff]
    %v55 = vld [vmem:[%s1 + $0x40] sm:$0xff]
    %v56 = vld [vmem:[%s1 + $0x48] sm:$0xff]
    %v57 = vld [vmem:[%s1 + $0x50] sm:$0xff]
    %v58 = vld [vmem:[%s1 + $0x58] sm:$0xff]
    %v59 = vld [vmem:[%s1 + $0x60] sm:$0xff]
    %v60 = vld [vmem:[%s1 + $0x68] sm:$0xff]
    %v61 = vld [vmem:[%s1 + $0x70] sm:$0xff]
    %v62 = vld [vmem:[%s1 + $0x78] sm:$0xff]
    %v63 = vld [vmem:[%s1 + $0x80] sm:$0xff]
    %v64 = vld [vmem:[%s1 + $0x88] sm:$0xff]
    %v65 = vld [vmem:[%s1 + $0x90] sm:$0xff]
    %v66 = vld [vmem:[%s1 + $0x98] sm:$0xff]
    %v67 = vld [vmem:[%s1 + $0xa0] sm:$0xff]
    %v68 = vld [vmem:[%s1 + $0xa8] sm:$0xff]
    %v69 = vld [vmem:[%s1 + $0xb0] sm:$0xff]
    %v70 = vld [vmem:[%s1 + $0xb8] sm:$0xff]
    %v71 = vld [vmem:[%s1 + $0xc0] sm:$0xff]
    %v72 = vld [vmem:[%s1 + $0xc8] sm:$0xff]
    %v73 = vld [vmem:[%s1 + $0xd0] sm:$0xff]
    %v74 = vld [vmem:[%s1 + $0xd8] sm:$0xff]
    %v75 = vld [vmem:[%s1 + $0xe0] sm:$0xff]
    %v76 = vld [vmem:[%s1 + $0xe8] sm:$0xff]
    %v77 = vld [vmem:[%s1 + $0xf0] sm:$0xff]
    %v78 = vld [vmem:[%s1 + $0xf8] sm:$0xff]
    %v79 = vld [vmem:[%s1 + $0x100] sm:$0xff]
    %v80 = vld [vmem:[%s1 + $0x108] sm:$0xff]
    %v81 = vld [vmem:[%s1 + $0x110] sm:$0xff]
    %v82 = vld [vmem:[%s1 + $0x118] sm:$0xff]
    %v83 = vld [vmem:[%s1 + $0x120] sm:$0xff]
    %v84 = vld [vmem:[%s1 + $0x128] sm:$0xff]
    %v85 = vld [vmem:[%s1 + $0x130] sm:$0xff]
    %v86 = vld [vmem:[%s1 + $0x138] sm:$0xff]
    %v87 = vld [vmem:[%s1 + $0x140] sm:$0xff]
    %v88 = vld [vmem:[%s1 + $0x148] sm:$0xff]
    %v89 = vld [vmem:[%s1 + $0x150] sm:$0xff]
    %v90 = vld [vmem:[%s1 + $0x158] sm:$0xff]
    %v91 = vld [vmem:[%s1 + $0x160] sm:$0xff]
    %v92 = vld [vmem:[%s1 + $0x168] sm:$0xff]
    %v93 = vld [vmem:[%s1 + $0x170] sm:$0xff]
    %v94 = vld [vmem:[%s1 + $0x178] sm:$0xff]
    %v95 = vld [vmem:[%s1 + $0x180] sm:$0xff]
    %v96 = vld [vmem:[%s1 + $0x188] sm:$0xff]
    %v97 = vld [vmem:[%s1 + $0x190] sm:$0xff]
    %v98 = vld [vmem:[%s1 + $0x198] sm:$0xff]
    %v99 = vld [vmem:[%s1 + $0x1a0] sm:$0xff]
    %v100 = vld [vmem:[%s1 + $0x1a8] sm:$0xff]
    %v101 = vld [vmem:[%s1 + $0x1b0] sm:$0xff]
    %v102 = vld [vmem:[%s1 + $0x1b8] sm:$0xff]
    %v103 = vld [vmem:[%s1 + $0x1c0] sm:$0xff]
    %v104 = vld [vmem:[%s1 + $0x1c8] sm:$0xff]
    %v105 = vld [vmem:[%s1 + $0x1d0] sm:$0xff]
    %v106 = vld [vmem:[%s1 + $0x1d8] sm:$0xff]
    %v107 = vld [vmem:[%s1 + $0x1e0] sm:$0xff]
    %v108 = vld [vmem:[%s1 + $0x1e8] sm:$0xff]
    %v109 = vld [vmem:[%s1 + $0x1f0] sm:$0xff]
    %v110 = vld [vmem:[%s1 + $0x1f8] sm:$0xff]
    %v111 = vld [vmem:[%s0] sm:$0xff]
    %v112 = vld [vmem:[%s0 + $0x1c] sm:$0xff]
    %v115 = vunpack.c.l.b16 %v111
    %v116 = vunpack.c.h.b16 %v111
    %v117 = vunpack.c.l.b16 %v112
    %v118 = vunpack.c.h.b16 %v112
    %v119 = vpack.c.b16 %v117, %v115
    %v120 = vpack.c.b16 %v118, %v116
    %v187 = vunpack.c.l.b16 %v47
    %v188 = vunpack.c.h.b16 %v47
    %v189 = vunpack.c.l.b16 %v48
    %v190 = vunpack.c.h.b16 %v48
    %v191 = vunpack.c.l.b16 %v49
    %v192 = vunpack.c.h.b16 %v49
    %v193 = vunpack.c.l.b16 %v50
    %v194 = vunpack.c.h.b16 %v50
    %v195 = vunpack.c.l.b16 %v51
    %v196 = vunpack.c.h.b16 %v51
    %v197 = vunpack.c.l.b16 %v52
    %v198 = vunpack.c.h.b16 %v52
    %v199 = vunpack.c.l.b16 %v53
    %v200 = vunpack.c.h.b16 %v53
    %v201 = vunpack.c.l.b16 %v54
    %v202 = vunpack.c.h.b16 %v54
    %v203 = vunpack.c.l.b16 %v55
    %v204 = vunpack.c.h.b16 %v55
    %v205 = vunpack.c.l.b16 %v56
    %v206 = vunpack.c.h.b16 %v56
    %v207 = vunpack.c.l.b16 %v57
    %v208 = vunpack.c.h.b16 %v57
    %v209 = vunpack.c.l.b16 %v58
    %v210 = vunpack.c.h.b16 %v58
    %v211 = vunpack.c.l.b16 %v59
    %v212 = vunpack.c.h.b16 %v59
    %v213 = vunpack.c.l.b16 %v60
    %v214 = vunpack.c.h.b16 %v60
    %v215 = vunpack.c.l.b16 %v61
    %v216 = vunpack.c.h.b16 %v61
    %v217 = vunpack.c.l.b16 %v62
    %v218 = vunpack.c.h.b16 %v62
    %v219 = vunpack.c.l.b16 %v63
    %v220 = vunpack.c.h.b16 %v63
    %v221 = vunpack.c.l.b16 %v64
    %v222 = vunpack.c.h.b16 %v64
    %v223 = vunpack.c.l.b16 %v65
    %v224 = vunpack.c.h.b16 %v65
    %v225 = vunpack.c.l.b16 %v66
    %v226 = vunpack.c.h.b16 %v66
    %v227 = vunpack.c.l.b16 %v67
    %v228 = vunpack.c.h.b16 %v67
    %v229 = vunpack.c.l.b16 %v68
    %v230 = vunpack.c.h.b16 %v68
    %v231 = vunpack.c.l.b16 %v69
    %v232 = vunpack.c.h.b16 %v69
    %v233 = vunpack.c.l.b16 %v70
    %v234 = vunpack.c.h.b16 %v70
    %v235 = vunpack.c.l.b16 %v71
    %v236 = vunpack.c.h.b16 %v71
    %v237 = vunpack.c.l.b16 %v72
    %v238 = vunpack.c.h.b16 %v72
    %v239 = vunpack.c.l.b16 %v73
    %v240 = vunpack.c.h.b16 %v73
    %v241 = vunpack.c.l.b16 %v74
    %v242 = vunpack.c.h.b16 %v74
    %v243 = vunpack.c.l.b16 %v75
    %v244 = vunpack.c.h.b16 %v75
    %v245 = vunpack.c.l.b16 %v76
    %v246 = vunpack.c.h.b16 %v76
    %v247 = vunpack.c.l.b16 %v77
    %v248 = vunpack.c.h.b16 %v77
    %v249 = vunpack.c.l.b16 %v78
    %v250 = vunpack.c.h.b16 %v78
    %v251 = vunpack.c.l.b16 %v79
    %v252 = vunpack.c.h.b16 %v79
    %v253 = vunpack.c.l.b16 %v80
    %v254 = vunpack.c.h.b16 %v80
    %v255 = vunpack.c.l.b16 %v81
    %v256 = vunpack.c.h.b16 %v81
    %v257 = vunpack.c.l.b16 %v82
    %v258 = vunpack.c.h.b16 %v82
    %v259 = vunpack.c.l.b16 %v83
    %v260 = vunpack.c.h.b16 %v83
    %v261 = vunpack.c.l.b16 %v84
    %v262 = vunpack.c.h.b16 %v84
    %v263 = vunpack.c.l.b16 %v85
    %v264 = vunpack.c.h.b16 %v85
    %v265 = vunpack.c.l.b16 %v86
    %v266 = vunpack.c.h.b16 %v86
    %v267 = vunpack.c.l.b16 %v87
    %v268 = vunpack.c.h.b16 %v87
    %v269 = vunpack.c.l.b16 %v88
    %v270 = vunpack.c.h.b16 %v88
    %v271 = vunpack.c.l.b16 %v89
    %v272 = vunpack.c.h.b16 %v89
    %v273 = vunpack.c.l.b16 %v90
    %v274 = vunpack.c.h.b16 %v90
    %v275 = vunpack.c.l.b16 %v91
    %v276 = vunpack.c.h.b16 %v91
    %v277 = vunpack.c.l.b16 %v92
    %v278 = vunpack.c.h.b16 %v92
    %v279 = vunpack.c.l.b16 %v93
    %v280 = vunpack.c.h.b16 %v93
    %v281 = vunpack.c.l.b16 %v94
    %v282 = vunpack.c.h.b16 %v94
    %v283 = vunpack.c.l.b16 %v95
    %v284 = vunpack.c.h.b16 %v95
    %v285 = vunpack.c.l.b16 %v96
    %v286 = vunpack.c.h.b16 %v96
    %v287 = vunpack.c.l.b16 %v97
    %v288 = vunpack.c.h.b16 %v97
    %v289 = vunpack.c.l.b16 %v98
    %v290 = vunpack.c.h.b16 %v98
    %v291 = vunpack.c.l.b16 %v99
    %v292 = vunpack.c.h.b16 %v99
    %v293 = vunpack.c.l.b16 %v100
    %v294 = vunpack.c.h.b16 %v100
    %v295 = vunpack.c.l.b16 %v101
    %v296 = vunpack.c.h.b16 %v101
    %v297 = vunpack.c.l.b16 %v102
    %v298 = vunpack.c.h.b16 %v102
    %v299 = vunpack.c.l.b16 %v103
    %v300 = vunpack.c.h.b16 %v103
    %v301 = vunpack.c.l.b16 %v104
    %v302 = vunpack.c.h.b16 %v104
    %v303 = vunpack.c.l.b16 %v105
    %v304 = vunpack.c.h.b16 %v105
    %v305 = vunpack.c.l.b16 %v106
    %v306 = vunpack.c.h.b16 %v106
    %v307 = vunpack.c.l.b16 %v107
    %v308 = vunpack.c.h.b16 %v107
    %v309 = vunpack.c.l.b16 %v108
    %v310 = vunpack.c.h.b16 %v108
    %v311 = vunpack.c.l.b16 %v109
    %v312 = vunpack.c.h.b16 %v109
    %v313 = vunpack.c.l.b16 %v110
    %v314 = vunpack.c.h.b16 %v110
    %v315 = vpack.c.b16 %v191, %v187
    %v316 = vpack.c.b16 %v192, %v188
    %v317 = vpack.c.b16 %v193, %v189
    %v318 = vpack.c.b16 %v194, %v190
    %v319 = vpack.c.b16 %v199, %v195
    %v320 = vpack.c.b16 %v200, %v196
    %v321 = vpack.c.b16 %v201, %v197
    %v322 = vpack.c.b16 %v202, %v198
    %v323 = vpack.c.b16 %v207, %v203
    %v324 = vpack.c.b16 %v208, %v204
    %v325 = vpack.c.b16 %v209, %v205
    %v326 = vpack.c.b16 %v210, %v206
    %v327 = vpack.c.b16 %v215, %v211
    %v328 = vpack.c.b16 %v216, %v212
    %v329 = vpack.c.b16 %v217, %v213
    %v330 = vpack.c.b16 %v218, %v214
    %v331 = vpack.c.b16 %v223, %v219
    %v332 = vpack.c.b16 %v224, %v220
    %v333 = vpack.c.b16 %v225, %v221
    %v334 = vpack.c.b16 %v226, %v222
    %v335 = vpack.c.b16 %v231, %v227
    %v336 = vpack.c.b16 %v232, %v228
    %v337 = vpack.c.b16 %v233, %v229
    %v338 = vpack.c.b16 %v234, %v230
    %v339 = vpack.c.b16 %v239, %v235
    %v340 = vpack.c.b16 %v240, %v236
    %v341 = vpack.c.b16 %v241, %v237
    %v342 = vpack.c.b16 %v242, %v238
    %v343 = vpack.c.b16 %v247, %v243
    %v344 = vpack.c.b16 %v248, %v244
    %v345 = vpack.c.b16 %v249, %v245
    %v346 = vpack.c.b16 %v250, %v246
    %v347 = vpack.c.b16 %v255, %v251
    %v348 = vpack.c.b16 %v256, %v252
    %v349 = vpack.c.b16 %v257, %v253
    %v350 = vpack.c.b16 %v258, %v254
    %v351 = vpack.c.b16 %v263, %v259
    %v352 = vpack.c.b16 %v264, %v260
    %v353 = vpack.c.b16 %v265, %v261
    %v354 = vpack.c.b16 %v266, %v262
    %v355 = vpack.c.b16 %v271, %v267
    %v356 = vpack.c.b16 %v272, %v268
    %v357 = vpack.c.b16 %v273, %v269
    %v358 = vpack.c.b16 %v274, %v270
    %v359 = vpack.c.b16 %v279, %v275
    %v360 = vpack.c.b16 %v280, %v276
    %v361 = vpack.c.b16 %v281, %v277
    %v362 = vpack.c.b16 %v282, %v278
    %v363 = vpack.c.b16 %v287, %v283
    %v364 = vpack.c.b16 %v288, %v284
    %v365 = vpack.c.b16 %v289, %v285
    %v366 = vpack.c.b16 %v290, %v286
    %v367 = vpack.c.b16 %v295, %v291
    %v368 = vpack.c.b16 %v296, %v292
    %v369 = vpack.c.b16 %v297, %v293
    %v370 = vpack.c.b16 %v298, %v294
    %v371 = vpack.c.b16 %v303, %v299
    %v372 = vpack.c.b16 %v304, %v300
    %v373 = vpack.c.b16 %v305, %v301
    %v374 = vpack.c.b16 %v306, %v302
    %v375 = vpack.c.b16 %v311, %v307
    %v376 = vpack.c.b16 %v312, %v308
    %v377 = vpack.c.b16 %v313, %v309
    %v378 = vpack.c.b16 %v314, %v310
    %443 = vmatprep.subr.bf16.mxu0 %v344
    %444 = vmatpush1.bf16.msra.mxu0 %v343
    %445 = vmatprep.subr.bf16.mxu0 %v340
    %446 = vmatpush1.bf16.msra.mxu0 %v339
    %447 = vmatprep.subr.bf16.mxu0 %v336
    %448 = vmatpush1.bf16.msra.mxu0 %v335
    %449 = vmatprep.subr.bf16.mxu0 %v332
    %450 = vmatpush1.bf16.msra.mxu0 %v331
    %451 = vmatprep.subr.bf16.mxu0 %v328
    %452 = vmatpush1.bf16.msra.mxu0 %v327
    %453 = vmatprep.subr.bf16.mxu0 %v324
    %454 = vmatpush1.bf16.msra.mxu0 %v323
    %455 = vmatprep.subr.bf16.mxu0 %v320
    %456 = vmatpush1.bf16.msra.mxu0 %v319
    %457 = vmatprep.subr.bf16.mxu0 %v316
    %458 = vmatpush1.bf16.msra.mxu0 %v315
    %459 = vmatprep.subr.bf16.mxu0 %v376
    %460 = vmatpush2.bf16.msra.mxu0 %v375
    %461 = vmatprep.subr.bf16.mxu0 %v372
    %462 = vmatpush2.bf16.msra.mxu0 %v371
    %463 = vmatprep.subr.bf16.mxu0 %v368
    %464 = vmatpush2.bf16.msra.mxu0 %v367
    %465 = vmatprep.subr.bf16.mxu0 %v364
    %466 = vmatpush2.bf16.msra.mxu0 %v363
    %467 = vmatprep.subr.bf16.mxu0 %v360
    %468 = vmatpush2.bf16.msra.mxu0 %v359
    %469 = vmatprep.subr.bf16.mxu0 %v356
    %470 = vmatpush2.bf16.msra.mxu0 %v355
    %471 = vmatprep.subr.bf16.mxu0 %v352
    %472 = vmatpush2.bf16.msra.mxu0 %v351
    %473 = vmatprep.subr.bf16.mxu0 %v348
    %474 = vmatpush2.bf16.msra.mxu0 %v347
    %475 = vmatprep.mubr.bf16.mxu0 %v120
    %476 = vmatmul.mubr.bf16.gmra.mxu0 %v119
    %v477 = vpop.f32.mrf.mxu0
    %v478 = vadd.f32 0.0, %v477
    %v479 = vpop.f32.mrf.mxu0
    %v480 = vadd.f32 0.0, %v479
    %v481 = vpop.f32.mrf.mxu0
    %v482 = vadd.f32 0.0, %v481
    %v483 = vpop.f32.mrf.mxu0
    %v484 = vadd.f32 0.0, %v483
    %485 = vdwg.mxu0
    %486 = vmatprep.subr.bf16.mxu0 %v346
    %487 = vmatpush1.bf16.msra.mxu0 %v345
    %488 = vmatprep.subr.bf16.mxu0 %v342
    %489 = vmatpush1.bf16.msra.mxu0 %v341
    %490 = vmatprep.subr.bf16.mxu0 %v338
    %491 = vmatpush1.bf16.msra.mxu0 %v337
    %492 = vmatprep.subr.bf16.mxu0 %v334
    %493 = vmatpush1.bf16.msra.mxu0 %v333
    %494 = vmatprep.subr.bf16.mxu0 %v330
    %495 = vmatpush1.bf16.msra.mxu0 %v329
    %496 = vmatprep.subr.bf16.mxu0 %v326
    %497 = vmatpush1.bf16.msra.mxu0 %v325
    %498 = vmatprep.subr.bf16.mxu0 %v322
    %499 = vmatpush1.bf16.msra.mxu0 %v321
    %500 = vmatprep.subr.bf16.mxu0 %v318
    %501 = vmatpush1.bf16.msra.mxu0 %v317
    %502 = vmatprep.subr.bf16.mxu0 %v378
    %503 = vmatpush2.bf16.msra.mxu0 %v377
    %504 = vmatprep.subr.bf16.mxu0 %v374
    %505 = vmatpush2.bf16.msra.mxu0 %v373
    %506 = vmatprep.subr.bf16.mxu0 %v370
    %507 = vmatpush2.bf16.msra.mxu0 %v369
    %508 = vmatprep.subr.bf16.mxu0 %v366
    %509 = vmatpush2.bf16.msra.mxu0 %v365
    %510 = vmatprep.subr.bf16.mxu0 %v362
    %511 = vmatpush2.bf16.msra.mxu0 %v361
    %512 = vmatprep.subr.bf16.mxu0 %v358
    %513 = vmatpush2.bf16.msra.mxu0 %v357
    %514 = vmatprep.subr.bf16.mxu0 %v354
    %515 = vmatpush2.bf16.msra.mxu0 %v353
    %516 = vmatprep.subr.bf16.mxu0 %v350
    %517 = vmatpush2.bf16.msra.mxu0 %v349
    %518 = vmatprep.mubr.bf16.mxu0 %v120
    %519 = vmatmul.mubr.bf16.gmra.mxu0 %v119
    %v520 = vpop.f32.mrf.mxu0
    %v521 = vadd.f32 0.0, %v520
    %v522 = vpop.f32.mrf.mxu0
    %v523 = vadd.f32 0.0, %v522
    %v524 = vpop.f32.mrf.mxu0
    %v525 = vadd.f32 0.0, %v524
    %v526 = vpop.f32.mrf.mxu0
    %v527 = vadd.f32 0.0, %v526
    %528 = vdwg.mxu0
    %v529 = vmax.f32 %v478, %v480
    %v530 = vmax.f32 %v482, %v484
    %v531 = vmax.f32 %v521, %v523
    %v532 = vmax.f32 %v525, %v527
    %v533 = vmax.f32 %v529, %v531
    %v534 = vmax.f32 %v530, %v532
    %v535 = vld [vmem:[%s0 + $0x4] sm:$0xff]
    %v536 = vld [vmem:[%s0 + $0x20] sm:$0xff]
    %v539 = vunpack.c.l.b16 %v535
    %v540 = vunpack.c.h.b16 %v535
    %v541 = vunpack.c.l.b16 %v536
    %v542 = vunpack.c.h.b16 %v536
    %v543 = vpack.c.b16 %v541, %v539
    %v544 = vpack.c.b16 %v542, %v540
    %547 = vmatprep.subr.bf16.mxu0 %v344
    %548 = vmatpush1.bf16.msra.mxu0 %v343
    %549 = vmatprep.subr.bf16.mxu0 %v340
    %550 = vmatpush1.bf16.msra.mxu0 %v339
    %551 = vmatprep.subr.bf16.mxu0 %v336
    %552 = vmatpush1.bf16.msra.mxu0 %v335
    %553 = vmatprep.subr.bf16.mxu0 %v332
    %554 = vmatpush1.bf16.msra.mxu0 %v331
    %555 = vmatprep.subr.bf16.mxu0 %v328
    %556 = vmatpush1.bf16.msra.mxu0 %v327
    %557 = vmatprep.subr.bf16.mxu0 %v324
    %558 = vmatpush1.bf16.msra.mxu0 %v323
    %559 = vmatprep.subr.bf16.mxu0 %v320
    %560 = vmatpush1.bf16.msra.mxu0 %v319
    %561 = vmatprep.subr.bf16.mxu0 %v316
    %562 = vmatpush1.bf16.msra.mxu0 %v315
    %563 = vmatprep.subr.bf16.mxu0 %v376
    %564 = vmatpush2.bf16.msra.mxu0 %v375
    %565 = vmatprep.subr.bf16.mxu0 %v372
    %566 = vmatpush2.bf16.msra.mxu0 %v371
    %567 = vmatprep.subr.bf16.mxu0 %v368
    %568 = vmatpush2.bf16.msra.mxu0 %v367
    %569 = vmatprep.subr.bf16.mxu0 %v364
    %570 = vmatpush2.bf16.msra.mxu0 %v363
    %571 = vmatprep.subr.bf16.mxu0 %v360
    %572 = vmatpush2.bf16.msra.mxu0 %v359
    %573 = vmatprep.subr.bf16.mxu0 %v356
    %574 = vmatpush2.bf16.msra.mxu0 %v355
    %575 = vmatprep.subr.bf16.mxu0 %v352
    %576 = vmatpush2.bf16.msra.mxu0 %v351
    %577 = vmatprep.subr.bf16.mxu0 %v348
    %578 = vmatpush2.bf16.msra.mxu0 %v347
    %579 = vmatprep.mubr.bf16.mxu0 %v544
    %580 = vmatmul.mubr.bf16.gmra.mxu0 %v543
    %v581 = vpop.f32.mrf.mxu0
    %v582 = vadd.f32 0.0, %v581
    %v583 = vpop.f32.mrf.mxu0
    %v584 = vadd.f32 0.0, %v583
    %v585 = vpop.f32.mrf.mxu0
    %v586 = vadd.f32 0.0, %v585
    %v587 = vpop.f32.mrf.mxu0
    %v588 = vadd.f32 0.0, %v587
    %589 = vdwg.mxu0
    %590 = vmatprep.subr.bf16.mxu0 %v346
    %591 = vmatpush1.bf16.msra.mxu0 %v345
    %592 = vmatprep.subr.bf16.mxu0 %v342
    %593 = vmatpush1.bf16.msra.mxu0 %v341
    %594 = vmatprep.subr.bf16.mxu0 %v338
    %595 = vmatpush1.bf16.msra.mxu0 %v337
    %596 = vmatprep.subr.bf16.mxu0 %v334
    %597 = vmatpush1.bf16.msra.mxu0 %v333
    %598 = vmatprep.subr.bf16.mxu0 %v330
    %599 = vmatpush1.bf16.msra.mxu0 %v329
    %600 = vmatprep.subr.bf16.mxu0 %v326
    %601 = vmatpush1.bf16.msra.mxu0 %v325
    %602 = vmatprep.subr.bf16.mxu0 %v322
    %603 = vmatpush1.bf16.msra.mxu0 %v321
    %604 = vmatprep.subr.bf16.mxu0 %v318
    %605 = vmatpush1.bf16.msra.mxu0 %v317
    %606 = vmatprep.subr.bf16.mxu0 %v378
    %607 = vmatpush2.bf16.msra.mxu0 %v377
    %608 = vmatprep.subr.bf16.mxu0 %v374
    %609 = vmatpush2.bf16.msra.mxu0 %v373
    %610 = vmatprep.subr.bf16.mxu0 %v370
    %611 = vmatpush2.bf16.msra.mxu0 %v369
    %612 = vmatprep.subr.bf16.mxu0 %v366
    %613 = vmatpush2.bf16.msra.mxu0 %v365
    %614 = vmatprep.subr.bf16.mxu0 %v362
    %615 = vmatpush2.bf16.msra.mxu0 %v361
    %616 = vmatprep.subr.bf16.mxu0 %v358
    %617 = vmatpush2.bf16.msra.mxu0 %v357
    %618 = vmatprep.subr.bf16.mxu0 %v354
    %619 = vmatpush2.bf16.msra.mxu0 %v353
    %620 = vmatprep.subr.bf16.mxu0 %v350
    %621 = vmatpush2.bf16.msra.mxu0 %v349
    %622 = vmatprep.mubr.bf16.mxu0 %v544
    %623 = vmatmul.mubr.bf16.gmra.mxu0 %v543
    %v624 = vpop.f32.mrf.mxu0
    %v625 = vadd.f32 0.0, %v624
    %v626 = vpop.f32.mrf.mxu0
    %v627 = vadd.f32 0.0, %v626
    %v628 = vpop.f32.mrf.mxu0
    %v629 = vadd.f32 0.0, %v628
    %v630 = vpop.f32.mrf.mxu0
    %v631 = vadd.f32 0.0, %v630
    %632 = vdwg.mxu0
    %v633 = vmax.f32 %v582, %v584
    %v634 = vmax.f32 %v586, %v588
    %v635 = vmax.f32 %v625, %v627
    %v636 = vmax.f32 %v629, %v631
    %v637 = vmax.f32 %v633, %v635
    %v638 = vmax.f32 %v634, %v636
    %v639 = vld [vmem:[%s0 + $0x8] sm:$0xff]
    %v640 = vld [vmem:[%s0 + $0x24] sm:$0xff]
    %v643 = vunpack.c.l.b16 %v639
    %v644 = vunpack.c.h.b16 %v639
    %v645 = vunpack.c.l.b16 %v640
    %v646 = vunpack.c.h.b16 %v640
    %v647 = vpack.c.b16 %v645, %v643
    %v648 = vpack.c.b16 %v646, %v644
    %651 = vmatprep.subr.bf16.mxu0 %v344
    %652 = vmatpush1.bf16.msra.mxu0 %v343
    %653 = vmatprep.subr.bf16.mxu0 %v340
    %654 = vmatpush1.bf16.msra.mxu0 %v339
    %655 = vmatprep.subr.bf16.mxu0 %v336
    %656 = vmatpush1.bf16.msra.mxu0 %v335
    %657 = vmatprep.subr.bf16.mxu0 %v332
    %658 = vmatpush1.bf16.msra.mxu0 %v331
    %659 = vmatprep.subr.bf16.mxu0 %v328
    %660 = vmatpush1.bf16.msra.mxu0 %v327
    %661 = vmatprep.subr.bf16.mxu0 %v324
    %662 = vmatpush1.bf16.msra.mxu0 %v323
    %663 = vmatprep.subr.bf16.mxu0 %v320
    %664 = vmatpush1.bf16.msra.mxu0 %v319
    %665 = vmatprep.subr.bf16.mxu0 %v316
    %666 = vmatpush1.bf16.msra.mxu0 %v315
    %667 = vmatprep.subr.bf16.mxu0 %v376
    %668 = vmatpush2.bf16.msra.mxu0 %v375
    %669 = vmatprep.subr.bf16.mxu0 %v372
    %670 = vmatpush2.bf16.msra.mxu0 %v371
    %671 = vmatprep.subr.bf16.mxu0 %v368
    %672 = vmatpush2.bf16.msra.mxu0 %v367
    %673 = vmatprep.subr.bf16.mxu0 %v364
    %674 = vmatpush2.bf16.msra.mxu0 %v363
    %675 = vmatprep.subr.bf16.mxu0 %v360
    %676 = vmatpush2.bf16.msra.mxu0 %v359
    %677 = vmatprep.subr.bf16.mxu0 %v356
    %678 = vmatpush2.bf16.msra.mxu0 %v355
    %679 = vmatprep.subr.bf16.mxu0 %v352
    %680 = vmatpush2.bf16.msra.mxu0 %v351
    %681 = vmatprep.subr.bf16.mxu0 %v348
    %682 = vmatpush2.bf16.msra.mxu0 %v347
    %683 = vmatprep.mubr.bf16.mxu0 %v648
    %684 = vmatmul.mubr.bf16.gmra.mxu0 %v647
    %v685 = vpop.f32.mrf.mxu0
    %v686 = vadd.f32 0.0, %v685
    %v687 = vpop.f32.mrf.mxu0
    %v688 = vadd.f32 0.0, %v687
    %v689 = vpop.f32.mrf.mxu0
    %v690 = vadd.f32 0.0, %v689
    %v691 = vpop.f32.mrf.mxu0
    %v692 = vadd.f32 0.0, %v691
    %693 = vdwg.mxu0
    %694 = vmatprep.subr.bf16.mxu0 %v346
    %695 = vmatpush1.bf16.msra.mxu0 %v345
    %696 = vmatprep.subr.bf16.mxu0 %v342
    %697 = vmatpush1.bf16.msra.mxu0 %v341
    %698 = vmatprep.subr.bf16.mxu0 %v338
    %699 = vmatpush1.bf16.msra.mxu0 %v337
    %700 = vmatprep.subr.bf16.mxu0 %v334
    %701 = vmatpush1.bf16.msra.mxu0 %v333
    %702 = vmatprep.subr.bf16.mxu0 %v330
    %703 = vmatpush1.bf16.msra.mxu0 %v329
    %704 = vmatprep.subr.bf16.mxu0 %v326
    %705 = vmatpush1.bf16.msra.mxu0 %v325
    %706 = vmatprep.subr.bf16.mxu0 %v322
    %707 = vmatpush1.bf16.msra.mxu0 %v321
    %708 = vmatprep.subr.bf16.mxu0 %v318
    %709 = vmatpush1.bf16.msra.mxu0 %v317
    %710 = vmatprep.subr.bf16.mxu0 %v378
    %711 = vmatpush2.bf16.msra.mxu0 %v377
    %712 = vmatprep.subr.bf16.mxu0 %v374
    %713 = vmatpush2.bf16.msra.mxu0 %v373
    %714 = vmatprep.subr.bf16.mxu0 %v370
    %715 = vmatpush2.bf16.msra.mxu0 %v369
    %716 = vmatprep.subr.bf16.mxu0 %v366
    %717 = vmatpush2.bf16.msra.mxu0 %v365
    %718 = vmatprep.subr.bf16.mxu0 %v362
    %719 = vmatpush2.bf16.msra.mxu0 %v361
    %720 = vmatprep.subr.bf16.mxu0 %v358
    %721 = vmatpush2.bf16.msra.mxu0 %v357
    %722 = vmatprep.subr.bf16.mxu0 %v354
    %723 = vmatpush2.bf16.msra.mxu0 %v353
    %724 = vmatprep.subr.bf16.mxu0 %v350
    %725 = vmatpush2.bf16.msra.mxu0 %v349
    %726 = vmatprep.mubr.bf16.mxu0 %v648
    %727 = vmatmul.mubr.bf16.gmra.mxu0 %v647
    %v728 = vpop.f32.mrf.mxu0
    %v729 = vadd.f32 0.0, %v728
    %v730 = vpop.f32.mrf.mxu0
    %v731 = vadd.f32 0.0, %v730
    %v732 = vpop.f32.mrf.mxu0
    %v733 = vadd.f32 0.0, %v732
    %v734 = vpop.f32.mrf.mxu0
    %v735 = vadd.f32 0.0, %v734
    %736 = vdwg.mxu0
    %v737 = vmax.f32 %v686, %v688
    %v738 = vmax.f32 %v690, %v692
    %v739 = vmax.f32 %v729, %v731
    %v740 = vmax.f32 %v733, %v735
    %v741 = vmax.f32 %v737, %v739
    %v742 = vmax.f32 %v738, %v740
    %v743 = vld [vmem:[%s0 + $0xc] sm:$0xff]
    %v744 = vld [vmem:[%s0 + $0x28] sm:$0xff]
    %v747 = vunpack.c.l.b16 %v743
    %v748 = vunpack.c.h.b16 %v743
    %v749 = vunpack.c.l.b16 %v744
    %v750 = vunpack.c.h.b16 %v744
    %v751 = vpack.c.b16 %v749, %v747
    %v752 = vpack.c.b16 %v750, %v748
    %755 = vmatprep.subr.bf16.mxu0 %v344
    %756 = vmatpush1.bf16.msra.mxu0 %v343
    %757 = vmatprep.subr.bf16.mxu0 %v340
    %758 = vmatpush1.bf16.msra.mxu0 %v339
    %759 = vmatprep.subr.bf16.mxu0 %v336
    %760 = vmatpush1.bf16.msra.mxu0 %v335
    %761 = vmatprep.subr.bf16.mxu0 %v332
    %762 = vmatpush1.bf16.msra.mxu0 %v331
    %763 = vmatprep.subr.bf16.mxu0 %v328
    %764 = vmatpush1.bf16.msra.mxu0 %v327
    %765 = vmatprep.subr.bf16.mxu0 %v324
    %766 = vmatpush1.bf16.msra.mxu0 %v323
    %767 = vmatprep.subr.bf16.mxu0 %v320
    %768 = vmatpush1.bf16.msra.mxu0 %v319
    %769 = vmatprep.subr.bf16.mxu0 %v316
    %770 = vmatpush1.bf16.msra.mxu0 %v315
    %771 = vmatprep.subr.bf16.mxu0 %v376
    %772 = vmatpush2.bf16.msra.mxu0 %v375
    %773 = vmatprep.subr.bf16.mxu0 %v372
    %774 = vmatpush2.bf16.msra.mxu0 %v371
    %775 = vmatprep.subr.bf16.mxu0 %v368
    %776 = vmatpush2.bf16.msra.mxu0 %v367
    %777 = vmatprep.subr.bf16.mxu0 %v364
    %778 = vmatpush2.bf16.msra.mxu0 %v363
    %779 = vmatprep.subr.bf16.mxu0 %v360
    %780 = vmatpush2.bf16.msra.mxu0 %v359
    %781 = vmatprep.subr.bf16.mxu0 %v356
    %782 = vmatpush2.bf16.msra.mxu0 %v355
    %783 = vmatprep.subr.bf16.mxu0 %v352
    %784 = vmatpush2.bf16.msra.mxu0 %v351
    %785 = vmatprep.subr.bf16.mxu0 %v348
    %786 = vmatpush2.bf16.msra.mxu0 %v347
    %787 = vmatprep.mubr.bf16.mxu0 %v752
    %788 = vmatmul.mubr.bf16.gmra.mxu0 %v751
    %v789 = vpop.f32.mrf.mxu0
    %v790 = vadd.f32 0.0, %v789
    %v791 = vpop.f32.mrf.mxu0
    %v792 = vadd.f32 0.0, %v791
    %v793 = vpop.f32.mrf.mxu0
    %v794 = vadd.f32 0.0, %v793
    %v795 = vpop.f32.mrf.mxu0
    %v796 = vadd.f32 0.0, %v795
    %797 = vdwg.mxu0
    %798 = vmatprep.subr.bf16.mxu0 %v346
    %799 = vmatpush1.bf16.msra.mxu0 %v345
    %800 = vmatprep.subr.bf16.mxu0 %v342
    %801 = vmatpush1.bf16.msra.mxu0 %v341
    %802 = vmatprep.subr.bf16.mxu0 %v338
    %803 = vmatpush1.bf16.msra.mxu0 %v337
    %804 = vmatprep.subr.bf16.mxu0 %v334
    %805 = vmatpush1.bf16.msra.mxu0 %v333
    %806 = vmatprep.subr.bf16.mxu0 %v330
    %807 = vmatpush1.bf16.msra.mxu0 %v329
    %808 = vmatprep.subr.bf16.mxu0 %v326
    %809 = vmatpush1.bf16.msra.mxu0 %v325
    %810 = vmatprep.subr.bf16.mxu0 %v322
    %811 = vmatpush1.bf16.msra.mxu0 %v321
    %812 = vmatprep.subr.bf16.mxu0 %v318
    %813 = vmatpush1.bf16.msra.mxu0 %v317
    %814 = vmatprep.subr.bf16.mxu0 %v378
    %815 = vmatpush2.bf16.msra.mxu0 %v377
    %816 = vmatprep.subr.bf16.mxu0 %v374
    %817 = vmatpush2.bf16.msra.mxu0 %v373
    %818 = vmatprep.subr.bf16.mxu0 %v370
    %819 = vmatpush2.bf16.msra.mxu0 %v369
    %820 = vmatprep.subr.bf16.mxu0 %v366
    %821 = vmatpush2.bf16.msra.mxu0 %v365
    %822 = vmatprep.subr.bf16.mxu0 %v362
    %823 = vmatpush2.bf16.msra.mxu0 %v361
    %824 = vmatprep.subr.bf16.mxu0 %v358
    %825 = vmatpush2.bf16.msra.mxu0 %v357
    %826 = vmatprep.subr.bf16.mxu0 %v354
    %827 = vmatpush2.bf16.msra.mxu0 %v353
    %828 = vmatprep.subr.bf16.mxu0 %v350
    %829 = vmatpush2.bf16.msra.mxu0 %v349
    %830 = vmatprep.mubr.bf16.mxu0 %v752
    %831 = vmatmul.mubr.bf16.gmra.mxu0 %v751
    %v832 = vpop.f32.mrf.mxu0
    %v833 = vadd.f32 0.0, %v832
    %v834 = vpop.f32.mrf.mxu0
    %v835 = vadd.f32 0.0, %v834
    %v836 = vpop.f32.mrf.mxu0
    %v837 = vadd.f32 0.0, %v836
    %v838 = vpop.f32.mrf.mxu0
    %v839 = vadd.f32 0.0, %v838
    %840 = vdwg.mxu0
    %v841 = vmax.f32 %v790, %v792
    %v842 = vmax.f32 %v794, %v796
    %v843 = vmax.f32 %v833, %v835
    %v844 = vmax.f32 %v837, %v839
    %v845 = vmax.f32 %v841, %v843
    %v846 = vmax.f32 %v842, %v844
    %v847 = vld [vmem:[%s0 + $0x10] sm:$0xff]
    %v848 = vld [vmem:[%s0 + $0x2c] sm:$0xff]
    %v851 = vunpack.c.l.b16 %v847
    %v852 = vunpack.c.h.b16 %v847
    %v853 = vunpack.c.l.b16 %v848
    %v854 = vunpack.c.h.b16 %v848
    %v855 = vpack.c.b16 %v853, %v851
    %v856 = vpack.c.b16 %v854, %v852
    %859 = vmatprep.subr.bf16.mxu0 %v344
    %860 = vmatpush1.bf16.msra.mxu0 %v343
    %861 = vmatprep.subr.bf16.mxu0 %v340
    %862 = vmatpush1.bf16.msra.mxu0 %v339
    %863 = vmatprep.subr.bf16.mxu0 %v336
    %864 = vmatpush1.bf16.msra.mxu0 %v335
    %865 = vmatprep.subr.bf16.mxu0 %v332
    %866 = vmatpush1.bf16.msra.mxu0 %v331
    %867 = vmatprep.subr.bf16.mxu0 %v328
    %868 = vmatpush1.bf16.msra.mxu0 %v327
    %869 = vmatprep.subr.bf16.mxu0 %v324
    %870 = vmatpush1.bf16.msra.mxu0 %v323
    %871 = vmatprep.subr.bf16.mxu0 %v320
    %872 = vmatpush1.bf16.msra.mxu0 %v319
    %873 = vmatprep.subr.bf16.mxu0 %v316
    %874 = vmatpush1.bf16.msra.mxu0 %v315
    %875 = vmatprep.subr.bf16.mxu0 %v376
    %876 = vmatpush2.bf16.msra.mxu0 %v375
    %877 = vmatprep.subr.bf16.mxu0 %v372
    %878 = vmatpush2.bf16.msra.mxu0 %v371
    %879 = vmatprep.subr.bf16.mxu0 %v368
    %880 = vmatpush2.bf16.msra.mxu0 %v367
    %881 = vmatprep.subr.bf16.mxu0 %v364
    %882 = vmatpush2.bf16.msra.mxu0 %v363
    %883 = vmatprep.subr.bf16.mxu0 %v360
    %884 = vmatpush2.bf16.msra.mxu0 %v359
    %885 = vmatprep.subr.bf16.mxu0 %v356
    %886 = vmatpush2.bf16.msra.mxu0 %v355
    %887 = vmatprep.subr.bf16.mxu0 %v352
    %888 = vmatpush2.bf16.msra.mxu0 %v351
    %889 = vmatprep.subr.bf16.mxu0 %v348
    %890 = vmatpush2.bf16.msra.mxu0 %v347
    %891 = vmatprep.mubr.bf16.mxu0 %v856
    %892 = vmatmul.mubr.bf16.gmra.mxu0 %v855
    %v893 = vpop.f32.mrf.mxu0
    %v894 = vadd.f32 0.0, %v893
    %v895 = vpop.f32.mrf.mxu0
    %v896 = vadd.f32 0.0, %v895
    %v897 = vpop.f32.mrf.mxu0
    %v898 = vadd.f32 0.0, %v897
    %v899 = vpop.f32.mrf.mxu0
    %v900 = vadd.f32 0.0, %v899
    %901 = vdwg.mxu0
    %902 = vmatprep.subr.bf16.mxu0 %v346
    %903 = vmatpush1.bf16.msra.mxu0 %v345
    %904 = vmatprep.subr.bf16.mxu0 %v342
    %905 = vmatpush1.bf16.msra.mxu0 %v341
    %906 = vmatprep.subr.bf16.mxu0 %v338
    %907 = vmatpush1.bf16.msra.mxu0 %v337
    %908 = vmatprep.subr.bf16.mxu0 %v334
    %909 = vmatpush1.bf16.msra.mxu0 %v333
    %910 = vmatprep.subr.bf16.mxu0 %v330
    %911 = vmatpush1.bf16.msra.mxu0 %v329
    %912 = vmatprep.subr.bf16.mxu0 %v326
    %913 = vmatpush1.bf16.msra.mxu0 %v325
    %914 = vmatprep.subr.bf16.mxu0 %v322
    %915 = vmatpush1.bf16.msra.mxu0 %v321
    %916 = vmatprep.subr.bf16.mxu0 %v318
    %917 = vmatpush1.bf16.msra.mxu0 %v317
    %918 = vmatprep.subr.bf16.mxu0 %v378
    %919 = vmatpush2.bf16.msra.mxu0 %v377
    %920 = vmatprep.subr.bf16.mxu0 %v374
    %921 = vmatpush2.bf16.msra.mxu0 %v373
    %922 = vmatprep.subr.bf16.mxu0 %v370
    %923 = vmatpush2.bf16.msra.mxu0 %v369
    %924 = vmatprep.subr.bf16.mxu0 %v366
    %925 = vmatpush2.bf16.msra.mxu0 %v365
    %926 = vmatprep.subr.bf16.mxu0 %v362
    %927 = vmatpush2.bf16.msra.mxu0 %v361
    %928 = vmatprep.subr.bf16.mxu0 %v358
    %929 = vmatpush2.bf16.msra.mxu0 %v357
    %930 = vmatprep.subr.bf16.mxu0 %v354
    %931 = vmatpush2.bf16.msra.mxu0 %v353
    %932 = vmatprep.subr.bf16.mxu0 %v350
    %933 = vmatpush2.bf16.msra.mxu0 %v349
    %934 = vmatprep.mubr.bf16.mxu0 %v856
    %935 = vmatmul.mubr.bf16.gmra.mxu0 %v855
    %v936 = vpop.f32.mrf.mxu0
    %v937 = vadd.f32 0.0, %v936
    %v938 = vpop.f32.mrf.mxu0
    %v939 = vadd.f32 0.0, %v938
    %v940 = vpop.f32.mrf.mxu0
    %v941 = vadd.f32 0.0, %v940
    %v942 = vpop.f32.mrf.mxu0
    %v943 = vadd.f32 0.0, %v942
    %944 = vdwg.mxu0
    %v945 = vmax.f32 %v894, %v896
    %v946 = vmax.f32 %v898, %v900
    %v947 = vmax.f32 %v937, %v939
    %v948 = vmax.f32 %v941, %v943
    %v949 = vmax.f32 %v945, %v947
    %v950 = vmax.f32 %v946, %v948
    %v951 = vld [vmem:[%s0 + $0x14] sm:$0xff]
    %v952 = vld [vmem:[%s0 + $0x30] sm:$0xff]
    %v955 = vunpack.c.l.b16 %v951
    %v956 = vunpack.c.h.b16 %v951
    %v957 = vunpack.c.l.b16 %v952
    %v958 = vunpack.c.h.b16 %v952
    %v959 = vpack.c.b16 %v957, %v955
    %v960 = vpack.c.b16 %v958, %v956
    %963 = vmatprep.subr.bf16.mxu0 %v344
    %964 = vmatpush1.bf16.msra.mxu0 %v343
    %965 = vmatprep.subr.bf16.mxu0 %v340
    %966 = vmatpush1.bf16.msra.mxu0 %v339
    %967 = vmatprep.subr.bf16.mxu0 %v336
    %968 = vmatpush1.bf16.msra.mxu0 %v335
    %969 = vmatprep.subr.bf16.mxu0 %v332
    %970 = vmatpush1.bf16.msra.mxu0 %v331
    %971 = vmatprep.subr.bf16.mxu0 %v328
    %972 = vmatpush1.bf16.msra.mxu0 %v327
    %973 = vmatprep.subr.bf16.mxu0 %v324
    %974 = vmatpush1.bf16.msra.mxu0 %v323
    %975 = vmatprep.subr.bf16.mxu0 %v320
    %976 = vmatpush1.bf16.msra.mxu0 %v319
    %977 = vmatprep.subr.bf16.mxu0 %v316
    %978 = vmatpush1.bf16.msra.mxu0 %v315
    %979 = vmatprep.subr.bf16.mxu0 %v376
    %980 = vmatpush2.bf16.msra.mxu0 %v375
    %981 = vmatprep.subr.bf16.mxu0 %v372
    %982 = vmatpush2.bf16.msra.mxu0 %v371
    %983 = vmatprep.subr.bf16.mxu0 %v368
    %984 = vmatpush2.bf16.msra.mxu0 %v367
    %985 = vmatprep.subr.bf16.mxu0 %v364
    %986 = vmatpush2.bf16.msra.mxu0 %v363
    %987 = vmatprep.subr.bf16.mxu0 %v360
    %988 = vmatpush2.bf16.msra.mxu0 %v359
    %989 = vmatprep.subr.bf16.mxu0 %v356
    %990 = vmatpush2.bf16.msra.mxu0 %v355
    %991 = vmatprep.subr.bf16.mxu0 %v352
    %992 = vmatpush2.bf16.msra.mxu0 %v351
    %993 = vmatprep.subr.bf16.mxu0 %v348
    %994 = vmatpush2.bf16.msra.mxu0 %v347
    %995 = vmatprep.mubr.bf16.mxu0 %v960
    %996 = vmatmul.mubr.bf16.gmra.mxu0 %v959
    %v997 = vpop.f32.mrf.mxu0
    %v998 = vadd.f32 0.0, %v997
    %v999 = vpop.f32.mrf.mxu0
    %v1000 = vadd.f32 0.0, %v999
    %v1001 = vpop.f32.mrf.mxu0
    %v1002 = vadd.f32 0.0, %v1001
    %v1003 = vpop.f32.mrf.mxu0
    %v1004 = vadd.f32 0.0, %v1003
    %1005 = vdwg.mxu0
    %1006 = vmatprep.subr.bf16.mxu0 %v346
    %1007 = vmatpush1.bf16.msra.mxu0 %v345
    %1008 = vmatprep.subr.bf16.mxu0 %v342
    %1009 = vmatpush1.bf16.msra.mxu0 %v341
    %1010 = vmatprep.subr.bf16.mxu0 %v338
    %1011 = vmatpush1.bf16.msra.mxu0 %v337
    %1012 = vmatprep.subr.bf16.mxu0 %v334
    %1013 = vmatpush1.bf16.msra.mxu0 %v333
    %1014 = vmatprep.subr.bf16.mxu0 %v330
    %1015 = vmatpush1.bf16.msra.mxu0 %v329
    %1016 = vmatprep.subr.bf16.mxu0 %v326
    %1017 = vmatpush1.bf16.msra.mxu0 %v325
    %1018 = vmatprep.subr.bf16.mxu0 %v322
    %1019 = vmatpush1.bf16.msra.mxu0 %v321
    %1020 = vmatprep.subr.bf16.mxu0 %v318
    %1021 = vmatpush1.bf16.msra.mxu0 %v317
    %1022 = vmatprep.subr.bf16.mxu0 %v378
    %1023 = vmatpush2.bf16.msra.mxu0 %v377
    %1024 = vmatprep.subr.bf16.mxu0 %v374
    %1025 = vmatpush2.bf16.msra.mxu0 %v373
    %1026 = vmatprep.subr.bf16.mxu0 %v370
    %1027 = vmatpush2.bf16.msra.mxu0 %v369
    %1028 = vmatprep.subr.bf16.mxu0 %v366
    %1029 = vmatpush2.bf16.msra.mxu0 %v365
    %1030 = vmatprep.subr.bf16.mxu0 %v362
    %1031 = vmatpush2.bf16.msra.mxu0 %v361
    %1032 = vmatprep.subr.bf16.mxu0 %v358
    %1033 = vmatpush2.bf16.msra.mxu0 %v357
    %1034 = vmatprep.subr.bf16.mxu0 %v354
    %1035 = vmatpush2.bf16.msra.mxu0 %v353
    %1036 = vmatprep.subr.bf16.mxu0 %v350
    %1037 = vmatpush2.bf16.msra.mxu0 %v349
    %1038 = vmatprep.mubr.bf16.mxu0 %v960
    %1039 = vmatmul.mubr.bf16.gmra.mxu0 %v959
    %v1040 = vpop.f32.mrf.mxu0
    %v1041 = vadd.f32 0.0, %v1040
    %v1042 = vpop.f32.mrf.mxu0
    %v1043 = vadd.f32 0.0, %v1042
    %v1044 = vpop.f32.mrf.mxu0
    %v1045 = vadd.f32 0.0, %v1044
    %v1046 = vpop.f32.mrf.mxu0
    %v1047 = vadd.f32 0.0, %v1046
    %1048 = vdwg.mxu0
    %v1049 = vmax.f32 %v998, %v1000
    %v1050 = vmax.f32 %v1002, %v1004
    %v1051 = vmax.f32 %v1041, %v1043
    %v1052 = vmax.f32 %v1045, %v1047
    %v1053 = vmax.f32 %v1049, %v1051
    %v1054 = vmax.f32 %v1050, %v1052
    %v1055 = vld [vmem:[%s2] sm:$0x3f]
    %v1057 = vlaneseq
    %v1058 = vshrl.u32 %v1057, 7
    %v1059 = vsub.s32 0, %v1058
    %v1060 = vrot.slane %v1055, %v1059
    %v1061 = vlaneseq
    %v1062 = vshrl.u32 %v1061, 7
    %v1063 = vsub.s32 1, %v1062
    %v1064 = vrot.slane %v1055, %v1063
    %v1065 = vlaneseq
    %v1066 = vshrl.u32 %v1065, 7
    %v1067 = vsub.s32 2, %v1066
    %v1068 = vrot.slane %v1055, %v1067
    %v1069 = vlaneseq
    %v1070 = vshrl.u32 %v1069, 7
    %v1071 = vsub.s32 3, %v1070
    %v1072 = vrot.slane %v1055, %v1071
    %v1073 = vlaneseq
    %v1074 = vshrl.u32 %v1073, 7
    %v1075 = vsub.s32 4, %v1074
    %v1076 = vrot.slane %v1055, %v1075
    %v1077 = vlaneseq
    %v1078 = vshrl.u32 %v1077, 7
    %v1079 = vsub.s32 5, %v1078
    %v1080 = vrot.slane %v1055, %v1079
    %v1087 = vadd.f32 %v533, %v1060
    %v1088 = vadd.f32 %v637, %v1064
    %v1089 = vadd.f32 %v741, %v1068
    %v1090 = vadd.f32 %v845, %v1072
    %v1091 = vadd.f32 %v949, %v1076
    %v1092 = vadd.f32 %v1053, %v1080
    %v1093 = vadd.f32 %v534, %v1060
    %v1094 = vadd.f32 %v638, %v1064
    %v1095 = vadd.f32 %v742, %v1068
    %v1096 = vadd.f32 %v846, %v1072
    %v1097 = vadd.f32 %v950, %v1076
    %v1098 = vadd.f32 %v1054, %v1080
    %v1099 = vmax.f32 %v1087, 0.0
    %v1100 = vmax.f32 %v1088, 0.0
    %v1101 = vmax.f32 %v1089, 0.0
    %v1102 = vmax.f32 %v1090, 0.0
    %v1103 = vmax.f32 %v1091, 0.0
    %v1104 = vmax.f32 %v1092, 0.0
    %v1105 = vmax.f32 %v1093, 0.0
    %v1106 = vmax.f32 %v1094, 0.0
    %v1107 = vmax.f32 %v1095, 0.0
    %v1108 = vmax.f32 %v1096, 0.0
    %v1109 = vmax.f32 %v1097, 0.0
    %v1110 = vmax.f32 %v1098, 0.0
    %v1111 = vpack.c.bf16 %v1105, %v1099
    %v1112 = vpack.c.bf16 %v1106, %v1100
    %v1113 = vpack.c.bf16 %v1107, %v1101
    %v1114 = vpack.c.bf16 %v1108, %v1102
    %v1115 = vpack.c.bf16 %v1109, %v1103
    %v1116 = vpack.c.bf16 %v1110, %v1104
    %v1117 = vld [vmem:[#allocation2] sm:$0xff]
    %v1118 = vld [vmem:[#allocation2 + $0x8] sm:$0xff]
    %v1119 = vld [vmem:[#allocation2 + $0x10] sm:$0xff]
    %v1120 = vld [vmem:[#allocation2 + $0x18] sm:$0xff]
    %v1121 = vld [vmem:[#allocation2 + $0x20] sm:$0xff]
    %v1122 = vld [vmem:[#allocation2 + $0x28] sm:$0xff]
    %v1123 = vld [vmem:[#allocation2 + $0x30] sm:$0xff]
    %v1124 = vld [vmem:[#allocation2 + $0x38] sm:$0xff]
    %v1125 = vld [vmem:[#allocation2 + $0x40] sm:$0xff]
    %v1126 = vld [vmem:[#allocation2 + $0x48] sm:$0xff]
    %v1127 = vld [vmem:[#allocation2 + $0x50] sm:$0xff]
    %v1128 = vld [vmem:[#allocation2 + $0x58] sm:$0xff]
    %v1129 = vld [vmem:[#allocation2 + $0x60] sm:$0xff]
    %v1130 = vld [vmem:[#allocation2 + $0x68] sm:$0xff]
    %v1131 = vld [vmem:[#allocation2 + $0x70] sm:$0xff]
    %v1132 = vld [vmem:[#allocation2 + $0x78] sm:$0xff]
    %v1133 = vld [vmem:[#allocation2 + $0x80] sm:$0xff]
    %v1134 = vld [vmem:[#allocation2 + $0x88] sm:$0xff]
    %v1135 = vld [vmem:[#allocation2 + $0x90] sm:$0xff]
    %v1136 = vld [vmem:[#allocation2 + $0x98] sm:$0xff]
    %v1137 = vld [vmem:[#allocation2 + $0xa0] sm:$0xff]
    %v1138 = vld [vmem:[#allocation2 + $0xa8] sm:$0xff]
    %v1139 = vld [vmem:[#allocation2 + $0xb0] sm:$0xff]
    %v1140 = vld [vmem:[#allocation2 + $0xb8] sm:$0xff]
    %v1141 = vld [vmem:[#allocation2 + $0xc0] sm:$0xff]
    %v1142 = vld [vmem:[#allocation2 + $0xc8] sm:$0xff]
    %v1143 = vld [vmem:[#allocation2 + $0xd0] sm:$0xff]
    %v1144 = vld [vmem:[#allocation2 + $0xd8] sm:$0xff]
    %v1145 = vld [vmem:[#allocation2 + $0xe0] sm:$0xff]
    %v1146 = vld [vmem:[#allocation2 + $0xe8] sm:$0xff]
    %v1147 = vld [vmem:[#allocation2 + $0xf0] sm:$0xff]
    %v1148 = vld [vmem:[#allocation2 + $0xf8] sm:$0xff]
    %v1149 = vld [vmem:[#allocation2 + $0x100] sm:$0xff]
    %v1150 = vld [vmem:[#allocation2 + $0x108] sm:$0xff]
    %v1151 = vld [vmem:[#allocation2 + $0x110] sm:$0xff]
    %v1152 = vld [vmem:[#allocation2 + $0x118] sm:$0xff]
    %v1153 = vld [vmem:[#allocation2 + $0x120] sm:$0xff]
    %v1154 = vld [vmem:[#allocation2 + $0x128] sm:$0xff]
    %v1155 = vld [vmem:[#allocation2 + $0x130] sm:$0xff]
    %v1156 = vld [vmem:[#allocation2 + $0x138] sm:$0xff]
    %v1157 = vld [vmem:[#allocation2 + $0x140] sm:$0xff]
    %v1158 = vld [vmem:[#allocation2 + $0x148] sm:$0xff]
    %v1159 = vld [vmem:[#allocation2 + $0x150] sm:$0xff]
    %v1160 = vld [vmem:[#allocation2 + $0x158] sm:$0xff]
    %v1161 = vld [vmem:[#allocation2 + $0x160] sm:$0xff]
    %v1162 = vld [vmem:[#allocation2 + $0x168] sm:$0xff]
    %v1163 = vld [vmem:[#allocation2 + $0x170] sm:$0xff]
    %v1164 = vld [vmem:[#allocation2 + $0x178] sm:$0xff]
    %v1165 = vld [vmem:[#allocation2 + $0x180] sm:$0xff]
    %v1166 = vld [vmem:[#allocation2 + $0x188] sm:$0xff]
    %v1167 = vld [vmem:[#allocation2 + $0x190] sm:$0xff]
    %v1168 = vld [vmem:[#allocation2 + $0x198] sm:$0xff]
    %v1169 = vld [vmem:[#allocation2 + $0x1a0] sm:$0xff]
    %v1170 = vld [vmem:[#allocation2 + $0x1a8] sm:$0xff]
    %v1171 = vld [vmem:[#allocation2 + $0x1b0] sm:$0xff]
    %v1172 = vld [vmem:[#allocation2 + $0x1b8] sm:$0xff]
    %v1173 = vld [vmem:[#allocation2 + $0x1c0] sm:$0xff]
    %v1174 = vld [vmem:[#allocation2 + $0x1c8] sm:$0xff]
    %v1175 = vld [vmem:[#allocation2 + $0x1d0] sm:$0xff]
    %v1176 = vld [vmem:[#allocation2 + $0x1d8] sm:$0xff]
    %v1177 = vld [vmem:[#allocation2 + $0x1e0] sm:$0xff]
    %v1178 = vld [vmem:[#allocation2 + $0x1e8] sm:$0xff]
    %v1179 = vld [vmem:[#allocation2 + $0x1f0] sm:$0xff]
    %v1180 = vld [vmem:[#allocation2 + $0x1f8] sm:$0xff]
    %v1181 = vld [vmem:[#allocation2 + $0x200] sm:$0xff]
    %v1182 = vld [vmem:[#allocation2 + $0x208] sm:$0xff]
    %v1183 = vld [vmem:[#allocation2 + $0x210] sm:$0xff]
    %v1184 = vld [vmem:[#allocation2 + $0x218] sm:$0xff]
    %v1185 = vld [vmem:[#allocation2 + $0x220] sm:$0xff]
    %v1186 = vld [vmem:[#allocation2 + $0x228] sm:$0xff]
    %v1187 = vld [vmem:[#allocation2 + $0x230] sm:$0xff]
    %v1188 = vld [vmem:[#allocation2 + $0x238] sm:$0xff]
    %v1189 = vld [vmem:[#allocation2 + $0x240] sm:$0xff]
    %v1190 = vld [vmem:[#allocation2 + $0x248] sm:$0xff]
    %v1191 = vld [vmem:[#allocation2 + $0x250] sm:$0xff]
    %v1192 = vld [vmem:[#allocation2 + $0x258] sm:$0xff]
    %v1193 = vld [vmem:[#allocation2 + $0x260] sm:$0xff]
    %v1194 = vld [vmem:[#allocation2 + $0x268] sm:$0xff]
    %v1195 = vld [vmem:[#allocation2 + $0x270] sm:$0xff]
    %v1196 = vld [vmem:[#allocation2 + $0x278] sm:$0xff]
    %v1197 = vld [vmem:[#allocation2 + $0x280] sm:$0xff]
    %v1198 = vld [vmem:[#allocation2 + $0x288] sm:$0xff]
    %v1199 = vld [vmem:[#allocation2 + $0x290] sm:$0xff]
    %v1200 = vld [vmem:[#allocation2 + $0x298] sm:$0xff]
    %v1201 = vld [vmem:[#allocation2 + $0x2a0] sm:$0xff]
    %v1202 = vld [vmem:[#allocation2 + $0x2a8] sm:$0xff]
    %v1203 = vld [vmem:[#allocation2 + $0x2b0] sm:$0xff]
    %v1204 = vld [vmem:[#allocation2 + $0x2b8] sm:$0xff]
    %v1205 = vld [vmem:[#allocation2 + $0x2c0] sm:$0xff]
    %v1206 = vld [vmem:[#allocation2 + $0x2c8] sm:$0xff]
    %v1207 = vld [vmem:[#allocation2 + $0x2d0] sm:$0xff]
    %v1208 = vld [vmem:[#allocation2 + $0x2d8] sm:$0xff]
    %v1209 = vld [vmem:[#allocation2 + $0x2e0] sm:$0xff]
    %v1210 = vld [vmem:[#allocation2 + $0x2e8] sm:$0xff]
    %v1211 = vld [vmem:[#allocation2 + $0x2f0] sm:$0xff]
    %v1212 = vld [vmem:[#allocation2 + $0x2f8] sm:$0xff]
    %v1213 = vld [vmem:[#allocation2 + $0x300] sm:$0xff]
    %v1214 = vld [vmem:[#allocation2 + $0x308] sm:$0xff]
    %v1215 = vld [vmem:[#allocation2 + $0x310] sm:$0xff]
    %v1216 = vld [vmem:[#allocation2 + $0x318] sm:$0xff]
    %v1217 = vld [vmem:[#allocation2 + $0x320] sm:$0xff]
    %v1218 = vld [vmem:[#allocation2 + $0x328] sm:$0xff]
    %v1219 = vld [vmem:[#allocation2 + $0x330] sm:$0xff]
    %v1220 = vld [vmem:[#allocation2 + $0x338] sm:$0xff]
    %v1221 = vld [vmem:[#allocation2 + $0x340] sm:$0xff]
    %v1222 = vld [vmem:[#allocation2 + $0x348] sm:$0xff]
    %v1223 = vld [vmem:[#allocation2 + $0x350] sm:$0xff]
    %v1224 = vld [vmem:[#allocation2 + $0x358] sm:$0xff]
    %v1225 = vld [vmem:[#allocation2 + $0x360] sm:$0xff]
    %v1226 = vld [vmem:[#allocation2 + $0x368] sm:$0xff]
    %v1227 = vld [vmem:[#allocation2 + $0x370] sm:$0xff]
    %v1228 = vld [vmem:[#allocation2 + $0x378] sm:$0xff]
    %v1229 = vld [vmem:[#allocation2 + $0x380] sm:$0xff]
    %v1230 = vld [vmem:[#allocation2 + $0x388] sm:$0xff]
    %v1231 = vld [vmem:[#allocation2 + $0x390] sm:$0xff]
    %v1232 = vld [vmem:[#allocation2 + $0x398] sm:$0xff]
    %v1233 = vld [vmem:[#allocation2 + $0x3a0] sm:$0xff]
    %v1234 = vld [vmem:[#allocation2 + $0x3a8] sm:$0xff]
    %v1235 = vld [vmem:[#allocation2 + $0x3b0] sm:$0xff]
    %v1236 = vld [vmem:[#allocation2 + $0x3b8] sm:$0xff]
    %v1237 = vld [vmem:[#allocation2 + $0x3c0] sm:$0xff]
    %v1238 = vld [vmem:[#allocation2 + $0x3c8] sm:$0xff]
    %v1239 = vld [vmem:[#allocation2 + $0x3d0] sm:$0xff]
    %v1240 = vld [vmem:[#allocation2 + $0x3d8] sm:$0xff]
    %v1241 = vld [vmem:[#allocation2 + $0x3e0] sm:$0xff]
    %v1242 = vld [vmem:[#allocation2 + $0x3e8] sm:$0xff]
    %v1243 = vld [vmem:[#allocation2 + $0x3f0] sm:$0xff]
    %v1244 = vld [vmem:[#allocation2 + $0x3f8] sm:$0xff]
    %v1373 = vunpack.c.l.b16 %v1117
    %v1374 = vunpack.c.h.b16 %v1117
    %v1375 = vunpack.c.l.b16 %v1118
    %v1376 = vunpack.c.h.b16 %v1118
    %v1377 = vunpack.c.l.b16 %v1119
    %v1378 = vunpack.c.h.b16 %v1119
    %v1379 = vunpack.c.l.b16 %v1120
    %v1380 = vunpack.c.h.b16 %v1120
    %v1381 = vunpack.c.l.b16 %v1121
    %v1382 = vunpack.c.h.b16 %v1121
    %v1383 = vunpack.c.l.b16 %v1122
    %v1384 = vunpack.c.h.b16 %v1122
    %v1385 = vunpack.c.l.b16 %v1123
    %v1386 = vunpack.c.h.b16 %v1123
    %v1387 = vunpack.c.l.b16 %v1124
    %v1388 = vunpack.c.h.b16 %v1124
    %v1389 = vunpack.c.l.b16 %v1125
    %v1390 = vunpack.c.h.b16 %v1125
    %v1391 = vunpack.c.l.b16 %v1126
    %v1392 = vunpack.c.h.b16 %v1126
    %v1393 = vunpack.c.l.b16 %v1127
    %v1394 = vunpack.c.h.b16 %v1127
    %v1395 = vunpack.c.l.b16 %v1128
    %v1396 = vunpack.c.h.b16 %v1128
    %v1397 = vunpack.c.l.b16 %v1129
    %v1398 = vunpack.c.h.b16 %v1129
    %v1399 = vunpack.c.l.b16 %v1130
    %v1400 = vunpack.c.h.b16 %v1130
    %v1401 = vunpack.c.l.b16 %v1131
    %v1402 = vunpack.c.h.b16 %v1131
    %v1403 = vunpack.c.l.b16 %v1132
    %v1404 = vunpack.c.h.b16 %v1132
    %v1405 = vunpack.c.l.b16 %v1133
    %v1406 = vunpack.c.h.b16 %v1133
    %v1407 = vunpack.c.l.b16 %v1134
    %v1408 = vunpack.c.h.b16 %v1134
    %v1409 = vunpack.c.l.b16 %v1135
    %v1410 = vunpack.c.h.b16 %v1135
    %v1411 = vunpack.c.l.b16 %v1136
    %v1412 = vunpack.c.h.b16 %v1136
    %v1413 = vunpack.c.l.b16 %v1137
    %v1414 = vunpack.c.h.b16 %v1137
    %v1415 = vunpack.c.l.b16 %v1138
    %v1416 = vunpack.c.h.b16 %v1138
    %v1417 = vunpack.c.l.b16 %v1139
    %v1418 = vunpack.c.h.b16 %v1139
    %v1419 = vunpack.c.l.b16 %v1140
    %v1420 = vunpack.c.h.b16 %v1140
    %v1421 = vunpack.c.l.b16 %v1141
    %v1422 = vunpack.c.h.b16 %v1141
    %v1423 = vunpack.c.l.b16 %v1142
    %v1424 = vunpack.c.h.b16 %v1142
    %v1425 = vunpack.c.l.b16 %v1143
    %v1426 = vunpack.c.h.b16 %v1143
    %v1427 = vunpack.c.l.b16 %v1144
    %v1428 = vunpack.c.h.b16 %v1144
    %v1429 = vunpack.c.l.b16 %v1145
    %v1430 = vunpack.c.h.b16 %v1145
    %v1431 = vunpack.c.l.b16 %v1146
    %v1432 = vunpack.c.h.b16 %v1146
    %v1433 = vunpack.c.l.b16 %v1147
    %v1434 = vunpack.c.h.b16 %v1147
    %v1435 = vunpack.c.l.b16 %v1148
    %v1436 = vunpack.c.h.b16 %v1148
    %v1437 = vunpack.c.l.b16 %v1149
    %v1438 = vunpack.c.h.b16 %v1149
    %v1439 = vunpack.c.l.b16 %v1150
    %v1440 = vunpack.c.h.b16 %v1150
    %v1441 = vunpack.c.l.b16 %v1151
    %v1442 = vunpack.c.h.b16 %v1151
    %v1443 = vunpack.c.l.b16 %v1152
    %v1444 = vunpack.c.h.b16 %v1152
    %v1445 = vunpack.c.l.b16 %v1153
    %v1446 = vunpack.c.h.b16 %v1153
    %v1447 = vunpack.c.l.b16 %v1154
    %v1448 = vunpack.c.h.b16 %v1154
    %v1449 = vunpack.c.l.b16 %v1155
    %v1450 = vunpack.c.h.b16 %v1155
    %v1451 = vunpack.c.l.b16 %v1156
    %v1452 = vunpack.c.h.b16 %v1156
    %v1453 = vunpack.c.l.b16 %v1157
    %v1454 = vunpack.c.h.b16 %v1157
    %v1455 = vunpack.c.l.b16 %v1158
    %v1456 = vunpack.c.h.b16 %v1158
    %v1457 = vunpack.c.l.b16 %v1159
    %v1458 = vunpack.c.h.b16 %v1159
    %v1459 = vunpack.c.l.b16 %v1160
    %v1460 = vunpack.c.h.b16 %v1160
    %v1461 = vunpack.c.l.b16 %v1161
    %v1462 = vunpack.c.h.b16 %v1161
    %v1463 = vunpack.c.l.b16 %v1162
    %v1464 = vunpack.c.h.b16 %v1162
    %v1465 = vunpack.c.l.b16 %v1163
    %v1466 = vunpack.c.h.b16 %v1163
    %v1467 = vunpack.c.l.b16 %v1164
    %v1468 = vunpack.c.h.b16 %v1164
    %v1469 = vunpack.c.l.b16 %v1165
    %v1470 = vunpack.c.h.b16 %v1165
    %v1471 = vunpack.c.l.b16 %v1166
    %v1472 = vunpack.c.h.b16 %v1166
    %v1473 = vunpack.c.l.b16 %v1167
    %v1474 = vunpack.c.h.b16 %v1167
    %v1475 = vunpack.c.l.b16 %v1168
    %v1476 = vunpack.c.h.b16 %v1168
    %v1477 = vunpack.c.l.b16 %v1169
    %v1478 = vunpack.c.h.b16 %v1169
    %v1479 = vunpack.c.l.b16 %v1170
    %v1480 = vunpack.c.h.b16 %v1170
    %v1481 = vunpack.c.l.b16 %v1171
    %v1482 = vunpack.c.h.b16 %v1171
    %v1483 = vunpack.c.l.b16 %v1172
    %v1484 = vunpack.c.h.b16 %v1172
    %v1485 = vunpack.c.l.b16 %v1173
    %v1486 = vunpack.c.h.b16 %v1173
    %v1487 = vunpack.c.l.b16 %v1174
    %v1488 = vunpack.c.h.b16 %v1174
    %v1489 = vunpack.c.l.b16 %v1175
    %v1490 = vunpack.c.h.b16 %v1175
    %v1491 = vunpack.c.l.b16 %v1176
    %v1492 = vunpack.c.h.b16 %v1176
    %v1493 = vunpack.c.l.b16 %v1177
    %v1494 = vunpack.c.h.b16 %v1177
    %v1495 = vunpack.c.l.b16 %v1178
    %v1496 = vunpack.c.h.b16 %v1178
    %v1497 = vunpack.c.l.b16 %v1179
    %v1498 = vunpack.c.h.b16 %v1179
    %v1499 = vunpack.c.l.b16 %v1180
    %v1500 = vunpack.c.h.b16 %v1180
    %v1501 = vunpack.c.l.b16 %v1181
    %v1502 = vunpack.c.h.b16 %v1181
    %v1503 = vunpack.c.l.b16 %v1182
    %v1504 = vunpack.c.h.b16 %v1182
    %v1505 = vunpack.c.l.b16 %v1183
    %v1506 = vunpack.c.h.b16 %v1183
    %v1507 = vunpack.c.l.b16 %v1184
    %v1508 = vunpack.c.h.b16 %v1184
    %v1509 = vunpack.c.l.b16 %v1185
    %v1510 = vunpack.c.h.b16 %v1185
    %v1511 = vunpack.c.l.b16 %v1186
    %v1512 = vunpack.c.h.b16 %v1186
    %v1513 = vunpack.c.l.b16 %v1187
    %v1514 = vunpack.c.h.b16 %v1187
    %v1515 = vunpack.c.l.b16 %v1188
    %v1516 = vunpack.c.h.b16 %v1188
    %v1517 = vunpack.c.l.b16 %v1189
    %v1518 = vunpack.c.h.b16 %v1189
    %v1519 = vunpack.c.l.b16 %v1190
    %v1520 = vunpack.c.h.b16 %v1190
    %v1521 = vunpack.c.l.b16 %v1191
    %v1522 = vunpack.c.h.b16 %v1191
    %v1523 = vunpack.c.l.b16 %v1192
    %v1524 = vunpack.c.h.b16 %v1192
    %v1525 = vunpack.c.l.b16 %v1193
    %v1526 = vunpack.c.h.b16 %v1193
    %v1527 = vunpack.c.l.b16 %v1194
    %v1528 = vunpack.c.h.b16 %v1194
    %v1529 = vunpack.c.l.b16 %v1195
    %v1530 = vunpack.c.h.b16 %v1195
    %v1531 = vunpack.c.l.b16 %v1196
    %v1532 = vunpack.c.h.b16 %v1196
    %v1533 = vunpack.c.l.b16 %v1197
    %v1534 = vunpack.c.h.b16 %v1197
    %v1535 = vunpack.c.l.b16 %v1198
    %v1536 = vunpack.c.h.b16 %v1198
    %v1537 = vunpack.c.l.b16 %v1199
    %v1538 = vunpack.c.h.b16 %v1199
    %v1539 = vunpack.c.l.b16 %v1200
    %v1540 = vunpack.c.h.b16 %v1200
    %v1541 = vunpack.c.l.b16 %v1201
    %v1542 = vunpack.c.h.b16 %v1201
    %v1543 = vunpack.c.l.b16 %v1202
    %v1544 = vunpack.c.h.b16 %v1202
    %v1545 = vunpack.c.l.b16 %v1203
    %v1546 = vunpack.c.h.b16 %v1203
    %v1547 = vunpack.c.l.b16 %v1204
    %v1548 = vunpack.c.h.b16 %v1204
    %v1549 = vunpack.c.l.b16 %v1205
    %v1550 = vunpack.c.h.b16 %v1205
    %v1551 = vunpack.c.l.b16 %v1206
    %v1552 = vunpack.c.h.b16 %v1206
    %v1553 = vunpack.c.l.b16 %v1207
    %v1554 = vunpack.c.h.b16 %v1207
    %v1555 = vunpack.c.l.b16 %v1208
    %v1556 = vunpack.c.h.b16 %v1208
    %v1557 = vunpack.c.l.b16 %v1209
    %v1558 = vunpack.c.h.b16 %v1209
    %v1559 = vunpack.c.l.b16 %v1210
    %v1560 = vunpack.c.h.b16 %v1210
    %v1561 = vunpack.c.l.b16 %v1211
    %v1562 = vunpack.c.h.b16 %v1211
    %v1563 = vunpack.c.l.b16 %v1212
    %v1564 = vunpack.c.h.b16 %v1212
    %v1565 = vunpack.c.l.b16 %v1213
    %v1566 = vunpack.c.h.b16 %v1213
    %v1567 = vunpack.c.l.b16 %v1214
    %v1568 = vunpack.c.h.b16 %v1214
    %v1569 = vunpack.c.l.b16 %v1215
    %v1570 = vunpack.c.h.b16 %v1215
    %v1571 = vunpack.c.l.b16 %v1216
    %v1572 = vunpack.c.h.b16 %v1216
    %v1573 = vunpack.c.l.b16 %v1217
    %v1574 = vunpack.c.h.b16 %v1217
    %v1575 = vunpack.c.l.b16 %v1218
    %v1576 = vunpack.c.h.b16 %v1218
    %v1577 = vunpack.c.l.b16 %v1219
    %v1578 = vunpack.c.h.b16 %v1219
    %v1579 = vunpack.c.l.b16 %v1220
    %v1580 = vunpack.c.h.b16 %v1220
    %v1581 = vunpack.c.l.b16 %v1221
    %v1582 = vunpack.c.h.b16 %v1221
    %v1583 = vunpack.c.l.b16 %v1222
    %v1584 = vunpack.c.h.b16 %v1222
    %v1585 = vunpack.c.l.b16 %v1223
    %v1586 = vunpack.c.h.b16 %v1223
    %v1587 = vunpack.c.l.b16 %v1224
    %v1588 = vunpack.c.h.b16 %v1224
    %v1589 = vunpack.c.l.b16 %v1225
    %v1590 = vunpack.c.h.b16 %v1225
    %v1591 = vunpack.c.l.b16 %v1226
    %v1592 = vunpack.c.h.b16 %v1226
    %v1593 = vunpack.c.l.b16 %v1227
    %v1594 = vunpack.c.h.b16 %v1227
    %v1595 = vunpack.c.l.b16 %v1228
    %v1596 = vunpack.c.h.b16 %v1228
    %v1597 = vunpack.c.l.b16 %v1229
    %v1598 = vunpack.c.h.b16 %v1229
    %v1599 = vunpack.c.l.b16 %v1230
    %v1600 = vunpack.c.h.b16 %v1230
    %v1601 = vunpack.c.l.b16 %v1231
    %v1602 = vunpack.c.h.b16 %v1231
    %v1603 = vunpack.c.l.b16 %v1232
    %v1604 = vunpack.c.h.b16 %v1232
    %v1605 = vunpack.c.l.b16 %v1233
    %v1606 = vunpack.c.h.b16 %v1233
    %v1607 = vunpack.c.l.b16 %v1234
    %v1608 = vunpack.c.h.b16 %v1234
    %v1609 = vunpack.c.l.b16 %v1235
    %v1610 = vunpack.c.h.b16 %v1235
    %v1611 = vunpack.c.l.b16 %v1236
    %v1612 = vunpack.c.h.b16 %v1236
    %v1613 = vunpack.c.l.b16 %v1237
    %v1614 = vunpack.c.h.b16 %v1237
    %v1615 = vunpack.c.l.b16 %v1238
    %v1616 = vunpack.c.h.b16 %v1238
    %v1617 = vunpack.c.l.b16 %v1239
    %v1618 = vunpack.c.h.b16 %v1239
    %v1619 = vunpack.c.l.b16 %v1240
    %v1620 = vunpack.c.h.b16 %v1240
    %v1621 = vunpack.c.l.b16 %v1241
    %v1622 = vunpack.c.h.b16 %v1241
    %v1623 = vunpack.c.l.b16 %v1242
    %v1624 = vunpack.c.h.b16 %v1242
    %v1625 = vunpack.c.l.b16 %v1243
    %v1626 = vunpack.c.h.b16 %v1243
    %v1627 = vunpack.c.l.b16 %v1244
    %v1628 = vunpack.c.h.b16 %v1244
    %v1629 = vpack.c.b16 %v1377, %v1373
    %v1630 = vpack.c.b16 %v1378, %v1374
    %v1631 = vpack.c.b16 %v1379, %v1375
    %v1632 = vpack.c.b16 %v1380, %v1376
    %v1633 = vpack.c.b16 %v1385, %v1381
    %v1634 = vpack.c.b16 %v1386, %v1382
    %v1635 = vpack.c.b16 %v1387, %v1383
    %v1636 = vpack.c.b16 %v1388, %v1384
    %v1637 = vpack.c.b16 %v1393, %v1389
    %v1638 = vpack.c.b16 %v1394, %v1390
    %v1639 = vpack.c.b16 %v1395, %v1391
    %v1640 = vpack.c.b16 %v1396, %v1392
    %v1641 = vpack.c.b16 %v1401, %v1397
    %v1642 = vpack.c.b16 %v1402, %v1398
    %v1643 = vpack.c.b16 %v1403, %v1399
    %v1644 = vpack.c.b16 %v1404, %v1400
    %v1645 = vpack.c.b16 %v1409, %v1405
    %v1646 = vpack.c.b16 %v1410, %v1406
    %v1647 = vpack.c.b16 %v1411, %v1407
    %v1648 = vpack.c.b16 %v1412, %v1408
    %v1649 = vpack.c.b16 %v1417, %v1413
    %v1650 = vpack.c.b16 %v1418, %v1414
    %v1651 = vpack.c.b16 %v1419, %v1415
    %v1652 = vpack.c.b16 %v1420, %v1416
    %v1653 = vpack.c.b16 %v1425, %v1421
    %v1654 = vpack.c.b16 %v1426, %v1422
    %v1655 = vpack.c.b16 %v1427, %v1423
    %v1656 = vpack.c.b16 %v1428, %v1424
    %v1657 = vpack.c.b16 %v1433, %v1429
    %v1658 = vpack.c.b16 %v1434, %v1430
    %v1659 = vpack.c.b16 %v1435, %v1431
    %v1660 = vpack.c.b16 %v1436, %v1432
    %v1661 = vpack.c.b16 %v1441, %v1437
    %v1662 = vpack.c.b16 %v1442, %v1438
    %v1663 = vpack.c.b16 %v1443, %v1439
    %v1664 = vpack.c.b16 %v1444, %v1440
    %v1665 = vpack.c.b16 %v1449, %v1445
    %v1666 = vpack.c.b16 %v1450, %v1446
    %v1667 = vpack.c.b16 %v1451, %v1447
    %v1668 = vpack.c.b16 %v1452, %v1448
    %v1669 = vpack.c.b16 %v1457, %v1453
    %v1670 = vpack.c.b16 %v1458, %v1454
    %v1671 = vpack.c.b16 %v1459, %v1455
    %v1672 = vpack.c.b16 %v1460, %v1456
    %v1673 = vpack.c.b16 %v1465, %v1461
    %v1674 = vpack.c.b16 %v1466, %v1462
    %v1675 = vpack.c.b16 %v1467, %v1463
    %v1676 = vpack.c.b16 %v1468, %v1464
    %v1677 = vpack.c.b16 %v1473, %v1469
    %v1678 = vpack.c.b16 %v1474, %v1470
    %v1679 = vpack.c.b16 %v1475, %v1471
    %v1680 = vpack.c.b16 %v1476, %v1472
    %v1681 = vpack.c.b16 %v1481, %v1477
    %v1682 = vpack.c.b16 %v1482, %v1478
    %v1683 = vpack.c.b16 %v1483, %v1479
    %v1684 = vpack.c.b16 %v1484, %v1480
    %v1685 = vpack.c.b16 %v1489, %v1485
    %v1686 = vpack.c.b16 %v1490, %v1486
    %v1687 = vpack.c.b16 %v1491, %v1487
    %v1688 = vpack.c.b16 %v1492, %v1488
    %v1689 = vpack.c.b16 %v1497, %v1493
    %v1690 = vpack.c.b16 %v1498, %v1494
    %v1691 = vpack.c.b16 %v1499, %v1495
    %v1692 = vpack.c.b16 %v1500, %v1496
    %v1693 = vpack.c.b16 %v1505, %v1501
    %v1694 = vpack.c.b16 %v1506, %v1502
    %v1695 = vpack.c.b16 %v1507, %v1503
    %v1696 = vpack.c.b16 %v1508, %v1504
    %v1697 = vpack.c.b16 %v1513, %v1509
    %v1698 = vpack.c.b16 %v1514, %v1510
    %v1699 = vpack.c.b16 %v1515, %v1511
    %v1700 = vpack.c.b16 %v1516, %v1512
    %v1701 = vpack.c.b16 %v1521, %v1517
    %v1702 = vpack.c.b16 %v1522, %v1518
    %v1703 = vpack.c.b16 %v1523, %v1519
    %v1704 = vpack.c.b16 %v1524, %v1520
    %v1705 = vpack.c.b16 %v1529, %v1525
    %v1706 = vpack.c.b16 %v1530, %v1526
    %v1707 = vpack.c.b16 %v1531, %v1527
    %v1708 = vpack.c.b16 %v1532, %v1528
    %v1709 = vpack.c.b16 %v1537, %v1533
    %v1710 = vpack.c.b16 %v1538, %v1534
    %v1711 = vpack.c.b16 %v1539, %v1535
    %v1712 = vpack.c.b16 %v1540, %v1536
    %v1713 = vpack.c.b16 %v1545, %v1541
    %v1714 = vpack.c.b16 %v1546, %v1542
    %v1715 = vpack.c.b16 %v1547, %v1543
    %v1716 = vpack.c.b16 %v1548, %v1544
    %v1717 = vpack.c.b16 %v1553, %v1549
    %v1718 = vpack.c.b16 %v1554, %v1550
    %v1719 = vpack.c.b16 %v1555, %v1551
    %v1720 = vpack.c.b16 %v1556, %v1552
    %v1721 = vpack.c.b16 %v1561, %v1557
    %v1722 = vpack.c.b16 %v1562, %v1558
    %v1723 = vpack.c.b16 %v1563, %v1559
    %v1724 = vpack.c.b16 %v1564, %v1560
    %v1725 = vpack.c.b16 %v1569, %v1565
    %v1726 = vpack.c.b16 %v1570, %v1566
    %v1727 = vpack.c.b16 %v1571, %v1567
    %v1728 = vpack.c.b16 %v1572, %v1568
    %v1729 = vpack.c.b16 %v1577, %v1573
    %v1730 = vpack.c.b16 %v1578, %v1574
    %v1731 = vpack.c.b16 %v1579, %v1575
    %v1732 = vpack.c.b16 %v1580, %v1576
    %v1733 = vpack.c.b16 %v1585, %v1581
    %v1734 = vpack.c.b16 %v1586, %v1582
    %v1735 = vpack.c.b16 %v1587, %v1583
    %v1736 = vpack.c.b16 %v1588, %v1584
    %v1737 = vpack.c.b16 %v1593, %v1589
    %v1738 = vpack.c.b16 %v1594, %v1590
    %v1739 = vpack.c.b16 %v1595, %v1591
    %v1740 = vpack.c.b16 %v1596, %v1592
    %v1741 = vpack.c.b16 %v1601, %v1597
    %v1742 = vpack.c.b16 %v1602, %v1598
    %v1743 = vpack.c.b16 %v1603, %v1599
    %v1744 = vpack.c.b16 %v1604, %v1600
    %v1745 = vpack.c.b16 %v1609, %v1605
    %v1746 = vpack.c.b16 %v1610, %v1606
    %v1747 = vpack.c.b16 %v1611, %v1607
    %v1748 = vpack.c.b16 %v1612, %v1608
    %v1749 = vpack.c.b16 %v1617, %v1613
    %v1750 = vpack.c.b16 %v1618, %v1614
    %v1751 = vpack.c.b16 %v1619, %v1615
    %v1752 = vpack.c.b16 %v1620, %v1616
    %v1753 = vpack.c.b16 %v1625, %v1621
    %v1754 = vpack.c.b16 %v1626, %v1622
    %v1755 = vpack.c.b16 %v1627, %v1623
    %v1756 = vpack.c.b16 %v1628, %v1624
    %1885 = vmatprep.subr.bf16.mxu0 %v1658
    %1886 = vmatpush1.bf16.msra.mxu0 %v1657
    %1887 = vmatprep.subr.bf16.mxu0 %v1654
    %1888 = vmatpush1.bf16.msra.mxu0 %v1653
    %1889 = vmatprep.subr.bf16.mxu0 %v1650
    %1890 = vmatpush1.bf16.msra.mxu0 %v1649
    %1891 = vmatprep.subr.bf16.mxu0 %v1646
    %1892 = vmatpush1.bf16.msra.mxu0 %v1645
    %1893 = vmatprep.subr.bf16.mxu0 %v1642
    %1894 = vmatpush1.bf16.msra.mxu0 %v1641
    %1895 = vmatprep.subr.bf16.mxu0 %v1638
    %1896 = vmatpush1.bf16.msra.mxu0 %v1637
    %1897 = vmatprep.subr.bf16.mxu0 %v1634
    %1898 = vmatpush1.bf16.msra.mxu0 %v1633
    %1899 = vmatprep.subr.bf16.mxu0 %v1630
    %1900 = vmatpush1.bf16.msra.mxu0 %v1629
    %1901 = vmatprep.subr.bf16.mxu0 %v1690
    %1902 = vmatpush2.bf16.msra.mxu0 %v1689
    %1903 = vmatprep.subr.bf16.mxu0 %v1686
    %1904 = vmatpush2.bf16.msra.mxu0 %v1685
    %1905 = vmatprep.subr.bf16.mxu0 %v1682
    %1906 = vmatpush2.bf16.msra.mxu0 %v1681
    %1907 = vmatprep.subr.bf16.mxu0 %v1678
    %1908 = vmatpush2.bf16.msra.mxu0 %v1677
    %1909 = vmatprep.subr.bf16.mxu0 %v1674
    %1910 = vmatpush2.bf16.msra.mxu0 %v1673
    %1911 = vmatprep.subr.bf16.mxu0 %v1670
    %1912 = vmatpush2.bf16.msra.mxu0 %v1669
    %1913 = vmatprep.subr.bf16.mxu0 %v1666
    %1914 = vmatpush2.bf16.msra.mxu0 %v1665
    %1915 = vmatprep.subr.bf16.mxu0 %v1662
    %1916 = vmatpush2.bf16.msra.mxu0 %v1661
    %1917 = vmatprep.mubr.bf16.mxu0 %v1112
    %1918 = vmatmul.mubr.bf16.gmra.mxu0 %v1111
    %v1919 = vpop.f32.mrf.mxu0
    %v1920 = vadd.f32 0.0, %v1919
    %v1921 = vpop.f32.mrf.mxu0
    %v1922 = vadd.f32 0.0, %v1921
    %v1923 = vpop.f32.mrf.mxu0
    %v1924 = vadd.f32 0.0, %v1923
    %v1925 = vpop.f32.mrf.mxu0
    %v1926 = vadd.f32 0.0, %v1925
    %1927 = vdwg.mxu0
    %1928 = vmatprep.subr.bf16.mxu0 %v1722
    %1929 = vmatpush1.bf16.msra.mxu0 %v1721
    %1930 = vmatprep.subr.bf16.mxu0 %v1718
    %1931 = vmatpush1.bf16.msra.mxu0 %v1717
    %1932 = vmatprep.subr.bf16.mxu0 %v1714
    %1933 = vmatpush1.bf16.msra.mxu0 %v1713
    %1934 = vmatprep.subr.bf16.mxu0 %v1710
    %1935 = vmatpush1.bf16.msra.mxu0 %v1709
    %1936 = vmatprep.subr.bf16.mxu0 %v1706
    %1937 = vmatpush1.bf16.msra.mxu0 %v1705
    %1938 = vmatprep.subr.bf16.mxu0 %v1702
    %1939 = vmatpush1.bf16.msra.mxu0 %v1701
    %1940 = vmatprep.subr.bf16.mxu0 %v1698
    %1941 = vmatpush1.bf16.msra.mxu0 %v1697
    %1942 = vmatprep.subr.bf16.mxu0 %v1694
    %1943 = vmatpush1.bf16.msra.mxu0 %v1693
    %1944 = vmatprep.subr.bf16.mxu0 %v1754
    %1945 = vmatpush2.bf16.msra.mxu0 %v1753
    %1946 = vmatprep.subr.bf16.mxu0 %v1750
    %1947 = vmatpush2.bf16.msra.mxu0 %v1749
    %1948 = vmatprep.subr.bf16.mxu0 %v1746
    %1949 = vmatpush2.bf16.msra.mxu0 %v1745
    %1950 = vmatprep.subr.bf16.mxu0 %v1742
    %1951 = vmatpush2.bf16.msra.mxu0 %v1741
    %1952 = vmatprep.subr.bf16.mxu0 %v1738
    %1953 = vmatpush2.bf16.msra.mxu0 %v1737
    %1954 = vmatprep.subr.bf16.mxu0 %v1734
    %1955 = vmatpush2.bf16.msra.mxu0 %v1733
    %1956 = vmatprep.subr.bf16.mxu0 %v1730
    %1957 = vmatpush2.bf16.msra.mxu0 %v1729
    %1958 = vmatprep.subr.bf16.mxu0 %v1726
    %1959 = vmatpush2.bf16.msra.mxu0 %v1725
    %1960 = vmatprep.mubr.bf16.mxu0 %v1114
    %1961 = vmatmul.mubr.bf16.gmra.mxu0 %v1113
    %v1962 = vpop.f32.mrf.mxu0
    %v1963 = vadd.f32 %v1920, %v1962
    %v1964 = vpop.f32.mrf.mxu0
    %v1965 = vadd.f32 %v1922, %v1964
    %v1966 = vpop.f32.mrf.mxu0
    %v1967 = vadd.f32 %v1924, %v1966
    %v1968 = vpop.f32.mrf.mxu0
    %v1969 = vadd.f32 %v1926, %v1968
    %1970 = vdwg.mxu0
    %1971 = vmatprep.subr.bf16.mxu0 %v1660
    %1972 = vmatpush1.bf16.msra.mxu0 %v1659
    %1973 = vmatprep.subr.bf16.mxu0 %v1656
    %1974 = vmatpush1.bf16.msra.mxu0 %v1655
    %1975 = vmatprep.subr.bf16.mxu0 %v1652
    %1976 = vmatpush1.bf16.msra.mxu0 %v1651
    %1977 = vmatprep.subr.bf16.mxu0 %v1648
    %1978 = vmatpush1.bf16.msra.mxu0 %v1647
    %1979 = vmatprep.subr.bf16.mxu0 %v1644
    %1980 = vmatpush1.bf16.msra.mxu0 %v1643
    %1981 = vmatprep.subr.bf16.mxu0 %v1640
    %1982 = vmatpush1.bf16.msra.mxu0 %v1639
    %1983 = vmatprep.subr.bf16.mxu0 %v1636
    %1984 = vmatpush1.bf16.msra.mxu0 %v1635
    %1985 = vmatprep.subr.bf16.mxu0 %v1632
    %1986 = vmatpush1.bf16.msra.mxu0 %v1631
    %1987 = vmatprep.subr.bf16.mxu0 %v1692
    %1988 = vmatpush2.bf16.msra.mxu0 %v1691
    %1989 = vmatprep.subr.bf16.mxu0 %v1688
    %1990 = vmatpush2.bf16.msra.mxu0 %v1687
    %1991 = vmatprep.subr.bf16.mxu0 %v1684
    %1992 = vmatpush2.bf16.msra.mxu0 %v1683
    %1993 = vmatprep.subr.bf16.mxu0 %v1680
    %1994 = vmatpush2.bf16.msra.mxu0 %v1679
    %1995 = vmatprep.subr.bf16.mxu0 %v1676
    %1996 = vmatpush2.bf16.msra.mxu0 %v1675
    %1997 = vmatprep.subr.bf16.mxu0 %v1672
    %1998 = vmatpush2.bf16.msra.mxu0 %v1671
    %1999 = vmatprep.subr.bf16.mxu0 %v1668
    %2000 = vmatpush2.bf16.msra.mxu0 %v1667
    %2001 = vmatprep.subr.bf16.mxu0 %v1664
    %2002 = vmatpush2.bf16.msra.mxu0 %v1663
    %2003 = vmatprep.mubr.bf16.mxu0 %v1112
    %2004 = vmatmul.mubr.bf16.gmra.mxu0 %v1111
    %v2005 = vpop.f32.mrf.mxu0
    %v2006 = vadd.f32 0.0, %v2005
    %v2007 = vpop.f32.mrf.mxu0
    %v2008 = vadd.f32 0.0, %v2007
    %v2009 = vpop.f32.mrf.mxu0
    %v2010 = vadd.f32 0.0, %v2009
    %v2011 = vpop.f32.mrf.mxu0
    %v2012 = vadd.f32 0.0, %v2011
    %2013 = vdwg.mxu0
    %2014 = vmatprep.subr.bf16.mxu0 %v1724
    %2015 = vmatpush1.bf16.msra.mxu0 %v1723
    %2016 = vmatprep.subr.bf16.mxu0 %v1720
    %2017 = vmatpush1.bf16.msra.mxu0 %v1719
    %2018 = vmatprep.subr.bf16.mxu0 %v1716
    %2019 = vmatpush1.bf16.msra.mxu0 %v1715
    %2020 = vmatprep.subr.bf16.mxu0 %v1712
    %2021 = vmatpush1.bf16.msra.mxu0 %v1711
    %2022 = vmatprep.subr.bf16.mxu0 %v1708
    %2023 = vmatpush1.bf16.msra.mxu0 %v1707
    %2024 = vmatprep.subr.bf16.mxu0 %v1704
    %2025 = vmatpush1.bf16.msra.mxu0 %v1703
    %2026 = vmatprep.subr.bf16.mxu0 %v1700
    %2027 = vmatpush1.bf16.msra.mxu0 %v1699
    %2028 = vmatprep.subr.bf16.mxu0 %v1696
    %2029 = vmatpush1.bf16.msra.mxu0 %v1695
    %2030 = vmatprep.subr.bf16.mxu0 %v1756
    %2031 = vmatpush2.bf16.msra.mxu0 %v1755
    %2032 = vmatprep.subr.bf16.mxu0 %v1752
    %2033 = vmatpush2.bf16.msra.mxu0 %v1751
    %2034 = vmatprep.subr.bf16.mxu0 %v1748
    %2035 = vmatpush2.bf16.msra.mxu0 %v1747
    %2036 = vmatprep.subr.bf16.mxu0 %v1744
    %2037 = vmatpush2.bf16.msra.mxu0 %v1743
    %2038 = vmatprep.subr.bf16.mxu0 %v1740
    %2039 = vmatpush2.bf16.msra.mxu0 %v1739
    %2040 = vmatprep.subr.bf16.mxu0 %v1736
    %2041 = vmatpush2.bf16.msra.mxu0 %v1735
    %2042 = vmatprep.subr.bf16.mxu0 %v1732
    %2043 = vmatpush2.bf16.msra.mxu0 %v1731
    %2044 = vmatprep.subr.bf16.mxu0 %v1728
    %2045 = vmatpush2.bf16.msra.mxu0 %v1727
    %2046 = vmatprep.mubr.bf16.mxu0 %v1114
    %2047 = vmatmul.mubr.bf16.gmra.mxu0 %v1113
    %v2048 = vpop.f32.mrf.mxu0
    %v2049 = vadd.f32 %v2006, %v2048
    %v2050 = vpop.f32.mrf.mxu0
    %v2051 = vadd.f32 %v2008, %v2050
    %v2052 = vpop.f32.mrf.mxu0
    %v2053 = vadd.f32 %v2010, %v2052
    %v2054 = vpop.f32.mrf.mxu0
    %v2055 = vadd.f32 %v2012, %v2054
    %2056 = vdwg.mxu0
    %v2057 = vmax.f32 %v1963, %v1965
    %v2058 = vmax.f32 %v1967, %v1969
    %v2059 = vmax.f32 %v2049, %v2051
    %v2060 = vmax.f32 %v2053, %v2055
    %v2061 = vmax.f32 %v2057, %v2059
    %v2062 = vmax.f32 %v2058, %v2060
    %2063 = vmatprep.subr.bf16.mxu0 %v1658
    %2064 = vmatpush1.bf16.msra.mxu0 %v1657
    %2065 = vmatprep.subr.bf16.mxu0 %v1654
    %2066 = vmatpush1.bf16.msra.mxu0 %v1653
    %2067 = vmatprep.subr.bf16.mxu0 %v1650
    %2068 = vmatpush1.bf16.msra.mxu0 %v1649
    %2069 = vmatprep.subr.bf16.mxu0 %v1646
    %2070 = vmatpush1.bf16.msra.mxu0 %v1645
    %2071 = vmatprep.subr.bf16.mxu0 %v1642
    %2072 = vmatpush1.bf16.msra.mxu0 %v1641
    %2073 = vmatprep.subr.bf16.mxu0 %v1638
    %2074 = vmatpush1.bf16.msra.mxu0 %v1637
    %2075 = vmatprep.subr.bf16.mxu0 %v1634
    %2076 = vmatpush1.bf16.msra.mxu0 %v1633
    %2077 = vmatprep.subr.bf16.mxu0 %v1630
    %2078 = vmatpush1.bf16.msra.mxu0 %v1629
    %2079 = vmatprep.subr.bf16.mxu0 %v1690
    %2080 = vmatpush2.bf16.msra.mxu0 %v1689
    %2081 = vmatprep.subr.bf16.mxu0 %v1686
    %2082 = vmatpush2.bf16.msra.mxu0 %v1685
    %2083 = vmatprep.subr.bf16.mxu0 %v1682
    %2084 = vmatpush2.bf16.msra.mxu0 %v1681
    %2085 = vmatprep.subr.bf16.mxu0 %v1678
    %2086 = vmatpush2.bf16.msra.mxu0 %v1677
    %2087 = vmatprep.subr.bf16.mxu0 %v1674
    %2088 = vmatpush2.bf16.msra.mxu0 %v1673
    %2089 = vmatprep.subr.bf16.mxu0 %v1670
    %2090 = vmatpush2.bf16.msra.mxu0 %v1669
    %2091 = vmatprep.subr.bf16.mxu0 %v1666
    %2092 = vmatpush2.bf16.msra.mxu0 %v1665
    %2093 = vmatprep.subr.bf16.mxu0 %v1662
    %2094 = vmatpush2.bf16.msra.mxu0 %v1661
    %2095 = vmatprep.mubr.bf16.mxu0 %v1114
    %2096 = vmatmul.mubr.bf16.gmra.mxu0 %v1113
    %v2097 = vpop.f32.mrf.mxu0
    %v2098 = vadd.f32 0.0, %v2097
    %v2099 = vpop.f32.mrf.mxu0
    %v2100 = vadd.f32 0.0, %v2099
    %v2101 = vpop.f32.mrf.mxu0
    %v2102 = vadd.f32 0.0, %v2101
    %v2103 = vpop.f32.mrf.mxu0
    %v2104 = vadd.f32 0.0, %v2103
    %2105 = vdwg.mxu0
    %2106 = vmatprep.subr.bf16.mxu0 %v1722
    %2107 = vmatpush1.bf16.msra.mxu0 %v1721
    %2108 = vmatprep.subr.bf16.mxu0 %v1718
    %2109 = vmatpush1.bf16.msra.mxu0 %v1717
    %2110 = vmatprep.subr.bf16.mxu0 %v1714
    %2111 = vmatpush1.bf16.msra.mxu0 %v1713
    %2112 = vmatprep.subr.bf16.mxu0 %v1710
    %2113 = vmatpush1.bf16.msra.mxu0 %v1709
    %2114 = vmatprep.subr.bf16.mxu0 %v1706
    %2115 = vmatpush1.bf16.msra.mxu0 %v1705
    %2116 = vmatprep.subr.bf16.mxu0 %v1702
    %2117 = vmatpush1.bf16.msra.mxu0 %v1701
    %2118 = vmatprep.subr.bf16.mxu0 %v1698
    %2119 = vmatpush1.bf16.msra.mxu0 %v1697
    %2120 = vmatprep.subr.bf16.mxu0 %v1694
    %2121 = vmatpush1.bf16.msra.mxu0 %v1693
    %2122 = vmatprep.subr.bf16.mxu0 %v1754
    %2123 = vmatpush2.bf16.msra.mxu0 %v1753
    %2124 = vmatprep.subr.bf16.mxu0 %v1750
    %2125 = vmatpush2.bf16.msra.mxu0 %v1749
    %2126 = vmatprep.subr.bf16.mxu0 %v1746
    %2127 = vmatpush2.bf16.msra.mxu0 %v1745
    %2128 = vmatprep.subr.bf16.mxu0 %v1742
    %2129 = vmatpush2.bf16.msra.mxu0 %v1741
    %2130 = vmatprep.subr.bf16.mxu0 %v1738
    %2131 = vmatpush2.bf16.msra.mxu0 %v1737
    %2132 = vmatprep.subr.bf16.mxu0 %v1734
    %2133 = vmatpush2.bf16.msra.mxu0 %v1733
    %2134 = vmatprep.subr.bf16.mxu0 %v1730
    %2135 = vmatpush2.bf16.msra.mxu0 %v1729
    %2136 = vmatprep.subr.bf16.mxu0 %v1726
    %2137 = vmatpush2.bf16.msra.mxu0 %v1725
    %2138 = vmatprep.mubr.bf16.mxu0 %v1116
    %2139 = vmatmul.mubr.bf16.gmra.mxu0 %v1115
    %v2140 = vpop.f32.mrf.mxu0
    %v2141 = vadd.f32 %v2098, %v2140
    %v2142 = vpop.f32.mrf.mxu0
    %v2143 = vadd.f32 %v2100, %v2142
    %v2144 = vpop.f32.mrf.mxu0
    %v2145 = vadd.f32 %v2102, %v2144
    %v2146 = vpop.f32.mrf.mxu0
    %v2147 = vadd.f32 %v2104, %v2146
    %2148 = vdwg.mxu0
    %2149 = vmatprep.subr.bf16.mxu0 %v1660
    %2150 = vmatpush1.bf16.msra.mxu0 %v1659
    %2151 = vmatprep.subr.bf16.mxu0 %v1656
    %2152 = vmatpush1.bf16.msra.mxu0 %v1655
    %2153 = vmatprep.subr.bf16.mxu0 %v1652
    %2154 = vmatpush1.bf16.msra.mxu0 %v1651
    %2155 = vmatprep.subr.bf16.mxu0 %v1648
    %2156 = vmatpush1.bf16.msra.mxu0 %v1647
    %2157 = vmatprep.subr.bf16.mxu0 %v1644
    %2158 = vmatpush1.bf16.msra.mxu0 %v1643
    %2159 = vmatprep.subr.bf16.mxu0 %v1640
    %2160 = vmatpush1.bf16.msra.mxu0 %v1639
    %2161 = vmatprep.subr.bf16.mxu0 %v1636
    %2162 = vmatpush1.bf16.msra.mxu0 %v1635
    %2163 = vmatprep.subr.bf16.mxu0 %v1632
    %2164 = vmatpush1.bf16.msra.mxu0 %v1631
    %2165 = vmatprep.subr.bf16.mxu0 %v1692
    %2166 = vmatpush2.bf16.msra.mxu0 %v1691
    %2167 = vmatprep.subr.bf16.mxu0 %v1688
    %2168 = vmatpush2.bf16.msra.mxu0 %v1687
    %2169 = vmatprep.subr.bf16.mxu0 %v1684
    %2170 = vmatpush2.bf16.msra.mxu0 %v1683
    %2171 = vmatprep.subr.bf16.mxu0 %v1680
    %2172 = vmatpush2.bf16.msra.mxu0 %v1679
    %2173 = vmatprep.subr.bf16.mxu0 %v1676
    %2174 = vmatpush2.bf16.msra.mxu0 %v1675
    %2175 = vmatprep.subr.bf16.mxu0 %v1672
    %2176 = vmatpush2.bf16.msra.mxu0 %v1671
    %2177 = vmatprep.subr.bf16.mxu0 %v1668
    %2178 = vmatpush2.bf16.msra.mxu0 %v1667
    %2179 = vmatprep.subr.bf16.mxu0 %v1664
    %2180 = vmatpush2.bf16.msra.mxu0 %v1663
    %2181 = vmatprep.mubr.bf16.mxu0 %v1114
    %2182 = vmatmul.mubr.bf16.gmra.mxu0 %v1113
    %v2183 = vpop.f32.mrf.mxu0
    %v2184 = vadd.f32 0.0, %v2183
    %v2185 = vpop.f32.mrf.mxu0
    %v2186 = vadd.f32 0.0, %v2185
    %v2187 = vpop.f32.mrf.mxu0
    %v2188 = vadd.f32 0.0, %v2187
    %v2189 = vpop.f32.mrf.mxu0
    %v2190 = vadd.f32 0.0, %v2189
    %2191 = vdwg.mxu0
    %2192 = vmatprep.subr.bf16.mxu0 %v1724
    %2193 = vmatpush1.bf16.msra.mxu0 %v1723
    %2194 = vmatprep.subr.bf16.mxu0 %v1720
    %2195 = vmatpush1.bf16.msra.mxu0 %v1719
    %2196 = vmatprep.subr.bf16.mxu0 %v1716
    %2197 = vmatpush1.bf16.msra.mxu0 %v1715
    %2198 = vmatprep.subr.bf16.mxu0 %v1712
    %2199 = vmatpush1.bf16.msra.mxu0 %v1711
    %2200 = vmatprep.subr.bf16.mxu0 %v1708
    %2201 = vmatpush1.bf16.msra.mxu0 %v1707
    %2202 = vmatprep.subr.bf16.mxu0 %v1704
    %2203 = vmatpush1.bf16.msra.mxu0 %v1703
    %2204 = vmatprep.subr.bf16.mxu0 %v1700
    %2205 = vmatpush1.bf16.msra.mxu0 %v1699
    %2206 = vmatprep.subr.bf16.mxu0 %v1696
    %2207 = vmatpush1.bf16.msra.mxu0 %v1695
    %2208 = vmatprep.subr.bf16.mxu0 %v1756
    %2209 = vmatpush2.bf16.msra.mxu0 %v1755
    %2210 = vmatprep.subr.bf16.mxu0 %v1752
    %2211 = vmatpush2.bf16.msra.mxu0 %v1751
    %2212 = vmatprep.subr.bf16.mxu0 %v1748
    %2213 = vmatpush2.bf16.msra.mxu0 %v1747
    %2214 = vmatprep.subr.bf16.mxu0 %v1744
    %2215 = vmatpush2.bf16.msra.mxu0 %v1743
    %2216 = vmatprep.subr.bf16.mxu0 %v1740
    %2217 = vmatpush2.bf16.msra.mxu0 %v1739
    %2218 = vmatprep.subr.bf16.mxu0 %v1736
    %2219 = vmatpush2.bf16.msra.mxu0 %v1735
    %2220 = vmatprep.subr.bf16.mxu0 %v1732
    %2221 = vmatpush2.bf16.msra.mxu0 %v1731
    %2222 = vmatprep.subr.bf16.mxu0 %v1728
    %2223 = vmatpush2.bf16.msra.mxu0 %v1727
    %2224 = vmatprep.mubr.bf16.mxu0 %v1116
    %2225 = vmatmul.mubr.bf16.gmra.mxu0 %v1115
    %v2226 = vpop.f32.mrf.mxu0
    %v2227 = vadd.f32 %v2184, %v2226
    %v2228 = vpop.f32.mrf.mxu0
    %v2229 = vadd.f32 %v2186, %v2228
    %v2230 = vpop.f32.mrf.mxu0
    %v2231 = vadd.f32 %v2188, %v2230
    %v2232 = vpop.f32.mrf.mxu0
    %v2233 = vadd.f32 %v2190, %v2232
    %2234 = vdwg.mxu0
    %v2235 = vmax.f32 %v2141, %v2143
    %v2236 = vmax.f32 %v2145, %v2147
    %v2237 = vmax.f32 %v2227, %v2229
    %v2238 = vmax.f32 %v2231, %v2233
    %v2239 = vmax.f32 %v2235, %v2237
    %v2240 = vmax.f32 %v2236, %v2238
    %v2241 = vld [vmem:[%s4] sm:$0x3]
    %v2243 = vlaneseq
    %v2244 = vshrl.u32 %v2243, 7
    %v2245 = vsub.s32 0, %v2244
    %v2246 = vrot.slane %v2241, %v2245
    %v2247 = vlaneseq
    %v2248 = vshrl.u32 %v2247, 7
    %v2249 = vsub.s32 1, %v2248
    %v2250 = vrot.slane %v2241, %v2249
    %v2253 = vadd.f32 %v2061, %v2246
    %v2254 = vadd.f32 %v2239, %v2250
    %v2255 = vadd.f32 %v2062, %v2246
    %v2256 = vadd.f32 %v2240, %v2250
    %v2257 = vmax.f32 %v2253, 0.0
    %v2258 = vmax.f32 %v2254, 0.0
    %v2259 = vmax.f32 %v2255, 0.0
    %v2260 = vmax.f32 %v2256, 0.0
    %v2261 = vpack.c.bf16 %v2259, %v2257
    %v2262 = vpack.c.bf16 %v2260, %v2258
    %v2263 = vld [vmem:[%s5] sm:$0xf]
    %v2264 = vld [vmem:[%s5 + $0x4] sm:$0xf]
    %v2265 = vld [vmem:[%s5 + $0x8] sm:$0xf]
    %v2266 = vld [vmem:[%s5 + $0xc] sm:$0xf]
    %v2267 = vld [vmem:[%s5 + $0x10] sm:$0xf]
    %v2268 = vld [vmem:[%s5 + $0x14] sm:$0xf]
    %v2269 = vld [vmem:[%s5 + $0x18] sm:$0xf]
    %v2270 = vld [vmem:[%s5 + $0x1c] sm:$0xf]
    %v2271 = vld [vmem:[%s5 + $0x20] sm:$0xf]
    %v2272 = vld [vmem:[%s5 + $0x24] sm:$0xf]
    %v2273 = vld [vmem:[%s5 + $0x28] sm:$0xf]
    %v2274 = vld [vmem:[%s5 + $0x2c] sm:$0xf]
    %v2275 = vld [vmem:[%s5 + $0x30] sm:$0xf]
    %v2276 = vld [vmem:[%s5 + $0x34] sm:$0xf]
    %v2277 = vld [vmem:[%s5 + $0x38] sm:$0xf]
    %v2278 = vld [vmem:[%s5 + $0x3c] sm:$0xf]
    %v2279 = vld [vmem:[%s5 + $0x40] sm:$0xf]
    %v2280 = vld [vmem:[%s5 + $0x44] sm:$0xf]
    %v2281 = vld [vmem:[%s5 + $0x48] sm:$0xf]
    %v2282 = vld [vmem:[%s5 + $0x4c] sm:$0xf]
    %v2283 = vld [vmem:[%s5 + $0x50] sm:$0xf]
    %v2284 = vld [vmem:[%s5 + $0x54] sm:$0xf]
    %v2285 = vld [vmem:[%s5 + $0x58] sm:$0xf]
    %v2286 = vld [vmem:[%s5 + $0x5c] sm:$0xf]
    %v2287 = vld [vmem:[%s5 + $0x60] sm:$0xf]
    %v2288 = vld [vmem:[%s5 + $0x64] sm:$0xf]
    %v2289 = vld [vmem:[%s5 + $0x68] sm:$0xf]
    %v2290 = vld [vmem:[%s5 + $0x6c] sm:$0xf]
    %v2291 = vld [vmem:[%s5 + $0x70] sm:$0xf]
    %v2292 = vld [vmem:[%s5 + $0x74] sm:$0xf]
    %v2293 = vld [vmem:[%s5 + $0x78] sm:$0xf]
    %v2294 = vld [vmem:[%s5 + $0x7c] sm:$0xf]
    %v2295 = vld [vmem:[%s6] sm:$0x1]
    %v2297 = vlaneseq
    %v2298 = vshrl.u32 %v2297, 7
    %v2299 = vsub.s32 0, %v2298
    %v2300 = vrot.slane %v2295, %v2299
    %v2334 = vunpack.c.l.b16 %v2263
    %v2335 = vunpack.c.l.b16 %v2264
    %v2336 = vunpack.c.l.b16 %v2265
    %v2337 = vunpack.c.l.b16 %v2266
    %v2338 = vunpack.c.l.b16 %v2267
    %v2339 = vunpack.c.l.b16 %v2268
    %v2340 = vunpack.c.l.b16 %v2269
    %v2341 = vunpack.c.l.b16 %v2270
    %v2342 = vunpack.c.l.b16 %v2271
    %v2343 = vunpack.c.l.b16 %v2272
    %v2344 = vunpack.c.l.b16 %v2273
    %v2345 = vunpack.c.l.b16 %v2274
    %v2346 = vunpack.c.l.b16 %v2275
    %v2347 = vunpack.c.l.b16 %v2276
    %v2348 = vunpack.c.l.b16 %v2277
    %v2349 = vunpack.c.l.b16 %v2278
    %v2350 = vunpack.c.l.b16 %v2279
    %v2351 = vunpack.c.l.b16 %v2280
    %v2352 = vunpack.c.l.b16 %v2281
    %v2353 = vunpack.c.l.b16 %v2282
    %v2354 = vunpack.c.l.b16 %v2283
    %v2355 = vunpack.c.l.b16 %v2284
    %v2356 = vunpack.c.l.b16 %v2285
    %v2357 = vunpack.c.l.b16 %v2286
    %v2358 = vunpack.c.l.b16 %v2287
    %v2359 = vunpack.c.l.b16 %v2288
    %v2360 = vunpack.c.l.b16 %v2289
    %v2361 = vunpack.c.l.b16 %v2290
    %v2362 = vunpack.c.l.b16 %v2291
    %v2363 = vunpack.c.l.b16 %v2292
    %v2364 = vunpack.c.l.b16 %v2293
    %v2365 = vunpack.c.l.b16 %v2294
    %v2366 = vpack.c.b16 %v2335, %v2334
    %v2367 = vpack.c.b16 %v2337, %v2336
    %v2368 = vpack.c.b16 %v2339, %v2338
    %v2369 = vpack.c.b16 %v2341, %v2340
    %v2370 = vpack.c.b16 %v2343, %v2342
    %v2371 = vpack.c.b16 %v2345, %v2344
    %v2372 = vpack.c.b16 %v2347, %v2346
    %v2373 = vpack.c.b16 %v2349, %v2348
    %v2374 = vpack.c.b16 %v2351, %v2350
    %v2375 = vpack.c.b16 %v2353, %v2352
    %v2376 = vpack.c.b16 %v2355, %v2354
    %v2377 = vpack.c.b16 %v2357, %v2356
    %v2378 = vpack.c.b16 %v2359, %v2358
    %v2379 = vpack.c.b16 %v2361, %v2360
    %v2380 = vpack.c.b16 %v2363, %v2362
    %v2381 = vpack.c.b16 %v2365, %v2364
    %2398 = vmatprep.subr.bf16.mxu0 0
    %2399 = vmatpush1.bf16.msra.mxu0 %v2373
    %2400 = vmatprep.subr.bf16.mxu0 0
    %2401 = vmatpush1.bf16.msra.mxu0 %v2372
    %2402 = vmatprep.subr.bf16.mxu0 0
    %2403 = vmatpush1.bf16.msra.mxu0 %v2371
    %2404 = vmatprep.subr.bf16.mxu0 0
    %2405 = vmatpush1.bf16.msra.mxu0 %v2370
    %2406 = vmatprep.subr.bf16.mxu0 0
    %2407 = vmatpush1.bf16.msra.mxu0 %v2369
    %2408 = vmatprep.subr.bf16.mxu0 0
    %2409 = vmatpush1.bf16.msra.mxu0 %v2368
    %2410 = vmatprep.subr.bf16.mxu0 0
    %2411 = vmatpush1.bf16.msra.mxu0 %v2367
    %2412 = vmatprep.subr.bf16.mxu0 0
    %2413 = vmatpush1.bf16.msra.mxu0 %v2366
    %2414 = vmatprep.subr.bf16.mxu0 0
    %2415 = vmatpush2.bf16.msra.mxu0 %v2381
    %2416 = vmatprep.subr.bf16.mxu0 0
    %2417 = vmatpush2.bf16.msra.mxu0 %v2380
    %2418 = vmatprep.subr.bf16.mxu0 0
    %2419 = vmatpush2.bf16.msra.mxu0 %v2379
    %2420 = vmatprep.subr.bf16.mxu0 0
    %2421 = vmatpush2.bf16.msra.mxu0 %v2378
    %2422 = vmatprep.subr.bf16.mxu0 0
    %2423 = vmatpush2.bf16.msra.mxu0 %v2377
    %2424 = vmatprep.subr.bf16.mxu0 0
    %2425 = vmatpush2.bf16.msra.mxu0 %v2376
    %2426 = vmatprep.subr.bf16.mxu0 0
    %2427 = vmatpush2.bf16.msra.mxu0 %v2375
    %2428 = vmatprep.subr.bf16.mxu0 0
    %2429 = vmatpush2.bf16.msra.mxu0 %v2374
    %2430 = vmatprep.mubr.bf16.mxu0 %v2262
    %2431 = vmatmul.mubr.bf16.gmra.mxu0 %v2261
    %v2432 = vpop.f32.mrf.mxu0
    %v2433 = vadd.f32 %v2300, %v2432
    %v2434 = vpop.f32.mrf.mxu0
    %v2435 = vpop.f32.mrf.mxu0
    %v2436 = vadd.f32 %v2300, %v2435
    %v2437 = vpop.f32.mrf.mxu0
    %2438 = vdwg.mxu0
    %v2439 = vmax.f32 %v2433, 0.0
    %v2440 = vmax.f32 %v2436, 0.0
    %v2441 = vpack.c.bf16 %v2440, %v2439
    %v2442 = vld [vmem:[%s7] sm:$0xf]
    %v2443 = vld [vmem:[%s7 + $0x4] sm:$0xf]
    %v2444 = vld [vmem:[%s7 + $0x8] sm:$0xf]
    %v2445 = vld [vmem:[%s7 + $0xc] sm:$0xf]
    %v2446 = vld [vmem:[%s7 + $0x10] sm:$0xf]
    %v2447 = vld [vmem:[%s7 + $0x14] sm:$0xf]
    %v2448 = vld [vmem:[%s7 + $0x18] sm:$0xf]
    %v2449 = vld [vmem:[%s7 + $0x1c] sm:$0xf]
    %v2450 = vld [vmem:[%s7 + $0x20] sm:$0xf]
    %v2451 = vld [vmem:[%s7 + $0x24] sm:$0xf]
    %v2452 = vld [vmem:[%s7 + $0x28] sm:$0xf]
    %v2453 = vld [vmem:[%s7 + $0x2c] sm:$0xf]
    %v2454 = vld [vmem:[%s7 + $0x30] sm:$0xf]
    %v2455 = vld [vmem:[%s7 + $0x34] sm:$0xf]
    %v2456 = vld [vmem:[%s7 + $0x38] sm:$0xf]
    %v2457 = vld [vmem:[%s7 + $0x3c] sm:$0xf]
    %v2458 = vld [vmem:[%s8] sm:$0x1]
    %v2460 = vlaneseq
    %v2461 = vshrl.u32 %v2460, 7
    %v2462 = vsub.s32 0, %v2461
    %v2463 = vrot.slane %v2458, %v2462
    %v2481 = vunpack.c.l.b16 %v2442
    %v2482 = vunpack.c.l.b16 %v2443
    %v2483 = vunpack.c.l.b16 %v2444
    %v2484 = vunpack.c.l.b16 %v2445
    %v2485 = vunpack.c.l.b16 %v2446
    %v2486 = vunpack.c.l.b16 %v2447
    %v2487 = vunpack.c.l.b16 %v2448
    %v2488 = vunpack.c.l.b16 %v2449
    %v2489 = vunpack.c.l.b16 %v2450
    %v2490 = vunpack.c.l.b16 %v2451
    %v2491 = vunpack.c.l.b16 %v2452
    %v2492 = vunpack.c.l.b16 %v2453
    %v2493 = vunpack.c.l.b16 %v2454
    %v2494 = vunpack.c.l.b16 %v2455
    %v2495 = vunpack.c.l.b16 %v2456
    %v2496 = vunpack.c.l.b16 %v2457
    %v2497 = vpack.c.b16 %v2482, %v2481
    %v2498 = vpack.c.b16 %v2484, %v2483
    %v2499 = vpack.c.b16 %v2486, %v2485
    %v2500 = vpack.c.b16 %v2488, %v2487
    %v2501 = vpack.c.b16 %v2490, %v2489
    %v2502 = vpack.c.b16 %v2492, %v2491
    %v2503 = vpack.c.b16 %v2494, %v2493
    %v2504 = vpack.c.b16 %v2496, %v2495
    %2513 = vmatprep.subr.bf16.mxu0 0
    %2514 = vmatpush1.bf16.msra.mxu0 %v2504
    %2515 = vmatprep.subr.bf16.mxu0 0
    %2516 = vmatpush1.bf16.msra.mxu0 %v2503
    %2517 = vmatprep.subr.bf16.mxu0 0
    %2518 = vmatpush1.bf16.msra.mxu0 %v2502
    %2519 = vmatprep.subr.bf16.mxu0 0
    %2520 = vmatpush1.bf16.msra.mxu0 %v2501
    %2521 = vmatprep.subr.bf16.mxu0 0
    %2522 = vmatpush1.bf16.msra.mxu0 %v2500
    %2523 = vmatprep.subr.bf16.mxu0 0
    %2524 = vmatpush1.bf16.msra.mxu0 %v2499
    %2525 = vmatprep.subr.bf16.mxu0 0
    %2526 = vmatpush1.bf16.msra.mxu0 %v2498
    %2527 = vmatprep.subr.bf16.mxu0 0
    %2528 = vmatpush1.bf16.msra.mxu0 %v2497
    %2529 = vmatprep.subr.bf16.mxu0 0
    %2530 = vmatpush2.bf16.msra.mxu0 0
    %2531 = vmatprep.subr.bf16.mxu0 0
    %2532 = vmatpush2.bf16.msra.mxu0 0
    %2533 = vmatprep.subr.bf16.mxu0 0
    %2534 = vmatpush2.bf16.msra.mxu0 0
    %2535 = vmatprep.subr.bf16.mxu0 0
    %2536 = vmatpush2.bf16.msra.mxu0 0
    %2537 = vmatprep.subr.bf16.mxu0 0
    %2538 = vmatpush2.bf16.msra.mxu0 0
    %2539 = vmatprep.subr.bf16.mxu0 0
    %2540 = vmatpush2.bf16.msra.mxu0 0
    %2541 = vmatprep.subr.bf16.mxu0 0
    %2542 = vmatpush2.bf16.msra.mxu0 0
    %2543 = vmatprep.subr.bf16.mxu0 0
    %2544 = vmatpush2.bf16.msra.mxu0 0
    %2545 = vmatprep.mubr.bf16.mxu0 0
    %2546 = vmatmul.mubr.bf16.gmra.mxu0 %v2441
    %v2547 = vpop.f32.mrf.mxu0
    %v2548 = vadd.f32 %v2463, %v2547
    %v2549 = vpop.f32.mrf.mxu0
    %v2550 = vpop.f32.mrf.mxu0
    %v2551 = vadd.f32 %v2463, %v2550
    %v2552 = vpop.f32.mrf.mxu0
    %2553 = vdwg.mxu0
    %2554 = vmax.xlane.f32.xlu0 %v2548
    %v2555 = vpop.xlane.xlu0 %2554
    %2556 = vmax.xlane.f32.xlu0 %v2551
    %v2557 = vpop.xlane.xlu0 %2556
    %v2558 = vsub.f32 %v2548, %v2555
    %v2559 = vsub.f32 %v2551, %v2557
    %v2560 = vmul.f32 %v2558, 1.442695
    %v2561 = vpow.pop %v2560
    %v2562 = vmul.f32 %v2559, 1.442695
    %v2563 = vpow.pop %v2562
    %2564 = vadd.xlane.f32.xlu0 %v2561
    %v2565 = vpop.xlane.xlu0 %2564
    %2566 = vadd.xlane.f32.xlu0 %v2563
    %v2567 = vpop.xlane.xlu0 %2566
    %v2568 = vlog2.pop %v2565
    %v2569 = vmul.f32 %v2568, 0.6931472
    %v2570 = vlog2.pop %v2567
    %v2571 = vmul.f32 %v2570, 0.6931472
    %v2572 = vsub.f32 %v2558, %v2569
    %v2573 = vsub.f32 %v2559, %v2571
    %2574 = vst [vmem:[%s9] sm:$0xff] %v2572
    %2575 = vst [vmem:[%s9 + $0x8] sm:$0xff] %v2573
    // Predicated region
    $region42: #{net_forward.1} parent=1 // pred_check
      _
    $region43: #{net_forward.1} parent=1 // pred_check_branch
      %2577 = sbr.rel (0) target = $region45
    $region44: #{net_forward.1} parent=1 // pred_region
      _
    $region45: #{net_forward.1} parent=1 // pred_fallthru
      _
    // Predicated region
    $region46: #{net_forward.1} parent=1 // pred_check
      _
    $region47: #{net_forward.1} parent=1 // pred_check_branch
      %2579 = sbr.rel (0) target = $region49
    $region48: #{net_forward.1} parent=1 // pred_region
      _
    $region49: #{net_forward.1} parent=1 // pred_fallthru
      _
    %2580 = vsyncpa [#allocation3], 1

</llo_original>
